<compile_context>
chip_gen: v7x
topology: tpu7x:2x2x1
jax: 0.10.0
libtpu: 0.0.40
codegen_flags: <defaults>
</compile_context>

<pallas_src>
import functools
import math

import jax
import jax.numpy as jnp
from jax.experimental import pallas as pl
from jax.experimental.pallas import tpu as pltpu

TEX_SIZE = 16      # configs.NEURAL_TEXTURE.SIZE
FEATURE_NUM = 12   # multiplicate-combine path uses channels 3:6, 6:9, 9:12
NGF = 16           # channels of the placeholder generator's hidden layer


# ----------------------------------------------------------------------------
# Fused kernel: bilinear texture sample -> multiplicative combine -> conv3x3
# (relu) -> conv3x3 (tanh).  All tensors are (C, H*W) with H*W on lanes.
# ----------------------------------------------------------------------------
def _fused_pipeline_kernel(uv_ref, tex_ref, normal_ref, view_ref, light_ref,
                           mask_ref, w1_ref, b1_ref, w2_ref, b2_ref,
                           x_ref, y_ref, *, tex_size, width):
    feat = tex_ref.shape[0]
    T = tex_size
    N = uv_ref.shape[2]                               # H*W (lane axis)

    # ---------------- bilinear texture sampling (gather-as-matmul) ----------
    # Separable one-hot construction: wuT/wvT are (T, N); the full (T*T, N)
    # bilinear weight matrix is their outer product along the texel axis.
    uv = uv_ref[0].astype(jnp.float32)                # (2, N), uv in [0, 1]
    # TODO(synk): uv convention assumed [0,1] scaled by (T-1) (align_corners
    # style, replicate-clamped at edges); verify against the reference Texture.
    u = uv[0:1, :] * (T - 1)
    v = uv[1:2, :] * (T - 1)

    u0 = jnp.clip(jnp.floor(u), 0.0, T - 1)
    v0 = jnp.clip(jnp.floor(v), 0.0, T - 1)
    u1 = jnp.clip(u0 + 1.0, 0.0, T - 1)
    v1 = jnp.clip(v0 + 1.0, 0.0, T - 1)
    fu = jnp.clip(u - u0, 0.0, 1.0)
    fv = jnp.clip(v - v0, 0.0, 1.0)

    ti = jax.lax.broadcasted_iota(jnp.int32, (T, N), 0)
    wuT = (jnp.where(ti == u0.astype(jnp.int32), 1.0 - fu, 0.0) +
           jnp.where(ti == u1.astype(jnp.int32), fu, 0.0))        # (T, N)
    wvT = (jnp.where(ti == v0.astype(jnp.int32), 1.0 - fv, 0.0) +
           jnp.where(ti == v1.astype(jnp.int32), fv, 0.0))        # (T, N)
    w_matT = (wvT.reshape(T, 1, N) * wuT.reshape(1, T, N)).reshape(T * T, N)

    # MXU gather: texT (F, T*T) @ w_matT (T*T, N) -> (F, N); bf16 in, f32 acc.
    sample = jnp.dot(tex_ref[...].astype(jnp.bfloat16),
                     w_matT.astype(jnp.bfloat16),
                     preferred_element_type=jnp.float32)          # (F, N) f32

    # ---------------- multiplicative combine, written lane-dense ------------
    normal = normal_ref[0].astype(jnp.float32)                    # (3, N)
    view = view_ref[0].astype(jnp.float32)                        # (3, 1)
    light = light_ref[0].astype(jnp.float32)                      # (3, 1)

    x_ref[0, 0:3, :] = sample[0:3, :].astype(x_ref.dtype)
    x_ref[0, 3:6, :] = (sample[3:6, :] * normal).astype(x_ref.dtype)
    x_ref[0, 6:9, :] = (sample[6:9, :] * view).astype(x_ref.dtype)
    x_ref[0, 9:12, :] = (sample[9:12, :] * light).astype(x_ref.dtype)
    if feat > 12:
        x_ref[0, 12:, :] = sample[12:, :].astype(x_ref.dtype)

    x = x_ref[0].astype(jnp.float32)                              # combined (F, N)

    # ---------------- generator: two 3x3 "same" convs via lane-rolled im2col
    masks = mask_ref[...].astype(jnp.float32)                     # (9, N) 0/1

    def im2col(z):                                   # (C, N) -> (9*C, N) bf16
        cols = []
        t = 0
        for dy in (-1, 0, 1):
            for dx in (-1, 0, 1):
                off = dy * width + dx
                shifted = jnp.roll(z, -off, axis=1) if off != 0 else z
                cols.append(shifted * masks[t:t + 1, :])          # zero halo
                t += 1
        return jnp.concatenate(cols, axis=0).astype(jnp.bfloat16)

    h1 = jnp.dot(w1_ref[...].astype(jnp.bfloat16), im2col(x),
                 preferred_element_type=jnp.float32)              # (ngf, N)
    h1 = jnp.maximum(h1 + b1_ref[...].astype(jnp.float32), 0.0)

    y = jnp.dot(w2_ref[...].astype(jnp.bfloat16), im2col(h1),
                preferred_element_type=jnp.float32)               # (3, N)
    y = jnp.tanh(y + b2_ref[...].astype(jnp.float32))
    y_ref[0] = y.astype(y_ref.dtype)


def _conv_boundary_masks(height, width):
    """(9, H*W) float masks; mask[t, n] == 1 iff 3x3 tap t of pixel n is in-bounds."""
    hh, ww = jnp.meshgrid(jnp.arange(height), jnp.arange(width), indexing="ij")
    hh = hh.reshape(1, -1)
    ww = ww.reshape(1, -1)
    rows = []
    for dy in (-1, 0, 1):
        for dx in (-1, 0, 1):
            rows.append((hh + dy >= 0) & (hh + dy < height) &
                        (ww + dx >= 0) & (ww + dx < width))
    return jnp.concatenate(rows, axis=0).astype(jnp.float32)


def fused_pipeline(uv, tex_t, normal, view, light, masks, w1, b1, w2, b2,
                   *, height, width):
    B = uv.shape[0]
    N = height * width
    F = tex_t.shape[0]
    T2 = tex_t.shape[1]
    CG = w1.shape[0]

    kernel = functools.partial(_fused_pipeline_kernel,
                               tex_size=TEX_SIZE, width=width)

    flops = 2 * B * N * (T2 * F + 9 * F * CG + 9 * CG * 3)
    bytes_accessed = 4 * int(uv.size + tex_t.size + normal.size + view.size +
                             light.size + masks.size + w1.size + b1.size +
                             w2.size + b2.size + B * F * N + B * 3 * N)
    cost = pl.CostEstimate(flops=flops, transcendentals=B * N * 3,
                           bytes_accessed=bytes_accessed)

    return pl.pallas_call(
        kernel,
        out_shape=(jax.ShapeDtypeStruct((B, F, N), jnp.float32),
                   jax.ShapeDtypeStruct((B, 3, N), jnp.float32)),
        grid=(B,),
        in_specs=[
            pl.BlockSpec((1, 2, N), lambda b: (b, 0, 0)),        # uv (u, v rows)
            pl.BlockSpec((F, T2), lambda b: (0, 0)),             # texture (F, T*T)
            pl.BlockSpec((1, 3, N), lambda b: (b, 0, 0)),        # normal
            pl.BlockSpec((1, 3, 1), lambda b: (b, 0, 0)),        # view_dir
            pl.BlockSpec((1, 3, 1), lambda b: (b, 0, 0)),        # light_dir
            pl.BlockSpec((9, N), lambda b: (0, 0)),              # conv halo masks
            pl.BlockSpec((CG, 9 * F), lambda b: (0, 0)),         # w1 (im2col flat)
            pl.BlockSpec((CG, 1), lambda b: (0, 0)),             # b1
            pl.BlockSpec((3, 9 * CG), lambda b: (0, 0)),         # w2
            pl.BlockSpec((3, 1), lambda b: (0, 0)),              # b2
        ],
        out_specs=(pl.BlockSpec((1, F, N), lambda b: (b, 0, 0)),
                   pl.BlockSpec((1, 3, N), lambda b: (b, 0, 0))),
        compiler_params=pltpu.CompilerParams(
            dimension_semantics=("parallel",),
            vmem_limit_bytes=32 * 1024 * 1024),
        cost_estimate=cost,
    )(uv, tex_t, normal, view, light, masks, w1, b1, w2, b2)


# ----------------------------------------------------------------------------
# Model wrapper: deterministic parameter init + forward pass
# ----------------------------------------------------------------------------
class NewGanPipelineModelPallas:
    def __init__(self, width, height, feature_num, key):
        self.width, self.height, self.feature_num = width, height, feature_num
        k0, k1, k2 = jax.random.split(key, 3)

        # Texture(SIZE, SIZE, feature_num): learnable neural texture, stored
        # transposed + flattened as (F, T*T) (texel index = v*T + u) so the
        # in-kernel gather-matmul directly yields the lane-dense (F, H*W).
        self.texture_t = 0.1 * jax.random.normal(
            k0, (feature_num, TEX_SIZE * TEX_SIZE), jnp.float32)

        # TODO(synk): configs.MODEL.GENERATE == 'Pix2Pix' implies a full U-Net
        # Generator(feature_num, 3, 64); that class is not defined in the
        # reference snippet, so a representative 2-layer 3x3 conv generator
        # (relu -> tanh) stands in for it.
        w1_hwio = jax.random.normal(k1, (3, 3, feature_num, NGF), jnp.float32) \
            * (1.0 / math.sqrt(9 * feature_num))
        w2_hwio = jax.random.normal(k2, (3, 3, NGF, 3), jnp.float32) \
            * (1.0 / math.sqrt(9 * NGF))
        # pre-flatten to (Cout, 9*Cin), matching the in-kernel im2col tap order
        self.w1 = jnp.transpose(w1_hwio, (3, 0, 1, 2)).reshape(NGF, 9 * feature_num)
        self.b1 = jnp.zeros((NGF, 1), jnp.float32)
        self.w2 = jnp.transpose(w2_hwio, (3, 0, 1, 2)).reshape(3, 9 * NGF)
        self.b2 = jnp.zeros((3, 1), jnp.float32)

    def __call__(self, uv_map, normal, view_dir, light_dir):
        # uv_map, normal: NCHW (B,3,H,W); view_dir, light_dir: (B,3) (DLV=False)
        B, _, H, W = uv_map.shape
        N = H * W
        # NCHW -> (B, C, H*W): pure reshape, pixels land on the lane axis.
        uv = uv_map.reshape(B, 3, N)[:, :2, :].astype(jnp.float32)
        normal_cn = normal.reshape(B, 3, N).astype(jnp.float32)
        view = view_dir.reshape(B, 3, 1).astype(jnp.float32)
        light = light_dir.reshape(B, 3, 1).astype(jnp.float32)
        masks = _conv_boundary_masks(H, W)

        x_cn, y_cn = fused_pipeline(uv, self.texture_t, normal_cn, view, light,
                                    masks, self.w1, self.b1, self.w2, self.b2,
                                    height=H, width=W)
        # TODO(synk): at real GAN resolutions (H*W >> 16K) add a spatial grid
        # axis with halo'd blocks so the (T*T, H*W) bilinear weights stay under
        # v7x's 64 MiB VMEM; the per-image block is fine at demo scale.
        x = x_cn.reshape(B, self.feature_num, H, W)
        y = y_cn.reshape(B, 3, H, W)
        return x, y


if __name__ == "__main__":
    B, H, W = 2, 16, 16
    key = jax.random.PRNGKey(0)
    k_uv, k_n, k_v, k_l, k_params = jax.random.split(key, 5)

    uv_map = jax.random.uniform(k_uv, (B, 3, H, W), jnp.float32)   # uv in [0,1]
    normal = jax.random.normal(k_n, (B, 3, H, W), jnp.float32)
    view_dir = jax.random.normal(k_v, (B, 3), jnp.float32)
    light_dir = jax.random.normal(k_l, (B, 3), jnp.float32)

    model = NewGanPipelineModelPallas(W, H, FEATURE_NUM, k_params)
    x, y = model(uv_map, normal, view_dir, light_dir)
    jax.block_until_ready((x, y))
    assert x.shape == (B, FEATURE_NUM, H, W) and y.shape == (B, 3, H, W)
    assert bool(jnp.all(jnp.isfinite(x))) and bool(jnp.all(jnp.isfinite(y)))
    print("KERNEL_OK")
</pallas_src>

<mosaic_0001>
module attributes {stable_mosaic.version = 11 : i64} {
  func.func @_fused_pipeline_kernel(%arg0: i32, %arg1: memref<1x2x256xf32, #tpu.memory_space<vmem>>, %arg2: memref<12x256xf32, #tpu.memory_space<vmem>>, %arg3: memref<1x3x256xf32, #tpu.memory_space<vmem>>, %arg4: memref<1x3x1xf32, #tpu.memory_space<vmem>>, %arg5: memref<1x3x1xf32, #tpu.memory_space<vmem>>, %arg6: memref<9x256xf32, #tpu.memory_space<vmem>>, %arg7: memref<16x108xf32, #tpu.memory_space<vmem>>, %arg8: memref<16x1xf32, #tpu.memory_space<vmem>>, %arg9: memref<3x144xf32, #tpu.memory_space<vmem>>, %arg10: memref<3x1xf32, #tpu.memory_space<vmem>>, %arg11: memref<1x12x256xf32, #tpu.memory_space<vmem>>, %arg12: memref<1x3x256xf32, #tpu.memory_space<vmem>>) attributes {dimension_semantics = [#tpu.dimension_semantics<parallel>], iteration_bounds = array<i64: 2>, scalar_prefetch = 0 : i64, scratch_operands = 0 : i64, tpu.core_type = #tpu.core_type<tc>, window_params = [{transform_indices = @transform_0, window_bounds = array<i64: 1, 2, 256>}, {pipeline_mode = #tpu.pipeline_mode<synchronous>, transform_indices = @transform_1, window_bounds = array<i64: 12, 256>}, {transform_indices = @transform_2, window_bounds = array<i64: 1, 3, 256>}, {transform_indices = @transform_3, window_bounds = array<i64: 1, 3, 1>}, {transform_indices = @transform_4, window_bounds = array<i64: 1, 3, 1>}, {pipeline_mode = #tpu.pipeline_mode<synchronous>, transform_indices = @transform_5, window_bounds = array<i64: 9, 256>}, {pipeline_mode = #tpu.pipeline_mode<synchronous>, transform_indices = @transform_6, window_bounds = array<i64: 16, 108>}, {pipeline_mode = #tpu.pipeline_mode<synchronous>, transform_indices = @transform_7, window_bounds = array<i64: 16, 1>}, {pipeline_mode = #tpu.pipeline_mode<synchronous>, transform_indices = @transform_8, window_bounds = array<i64: 3, 144>}, {pipeline_mode = #tpu.pipeline_mode<synchronous>, transform_indices = @transform_9, window_bounds = array<i64: 3, 1>}, {transform_indices = @transform_10, window_bounds = array<i64: 1, 12, 256>}, {transform_indices = @transform_11, window_bounds = array<i64: 1, 3, 256>}]} {
    %c0 = arith.constant 0 : index
    %c0_0 = arith.constant 0 : index
    %c0_1 = arith.constant 0 : index
    %0 = vector.load %arg1[%c0, %c0_0, %c0_1] : memref<1x2x256xf32, #tpu.memory_space<vmem>>, vector<1x2x256xf32>
    %1 = vector.shape_cast %0 : vector<1x2x256xf32> to vector<2x256xf32>
    %2 = vector.extract_strided_slice %1 {offsets = [0, 0], sizes = [1, 256], strides = [1, 1]} : vector<2x256xf32> to vector<1x256xf32>
    %cst = arith.constant 1.500000e+01 : f32
    %3 = vector.broadcast %cst : f32 to vector<1x256xf32>
    %4 = arith.mulf %2, %3 : vector<1x256xf32>
    %5 = vector.extract_strided_slice %1 {offsets = [1, 0], sizes = [1, 256], strides = [1, 1]} : vector<2x256xf32> to vector<1x256xf32>
    %cst_2 = arith.constant 1.500000e+01 : f32
    %6 = vector.broadcast %cst_2 : f32 to vector<1x256xf32>
    %7 = arith.mulf %5, %6 : vector<1x256xf32>
    %8 = math.floor %4 : vector<1x256xf32>
    %cst_3 = arith.constant 0.000000e+00 : f32
    %c15_i32 = arith.constant 15 : i32
    %9 = vector.broadcast %cst_3 : f32 to vector<1x256xf32>
    %10 = arith.maximumf %9, %8 : vector<1x256xf32>
    %11 = arith.sitofp %c15_i32 : i32 to f32
    %12 = vector.broadcast %11 : f32 to vector<1x256xf32>
    %13 = arith.minimumf %12, %10 : vector<1x256xf32>
    %14 = math.floor %7 : vector<1x256xf32>
    %cst_4 = arith.constant 0.000000e+00 : f32
    %c15_i32_5 = arith.constant 15 : i32
    %15 = vector.broadcast %cst_4 : f32 to vector<1x256xf32>
    %16 = arith.maximumf %15, %14 : vector<1x256xf32>
    %17 = arith.sitofp %c15_i32_5 : i32 to f32
    %18 = vector.broadcast %17 : f32 to vector<1x256xf32>
    %19 = arith.minimumf %18, %16 : vector<1x256xf32>
    %cst_6 = arith.constant 1.000000e+00 : f32
    %20 = vector.broadcast %cst_6 : f32 to vector<1x256xf32>
    %21 = arith.addf %13, %20 : vector<1x256xf32>
    %cst_7 = arith.constant 0.000000e+00 : f32
    %c15_i32_8 = arith.constant 15 : i32
    %22 = vector.broadcast %cst_7 : f32 to vector<1x256xf32>
    %23 = arith.maximumf %22, %21 : vector<1x256xf32>
    %24 = arith.sitofp %c15_i32_8 : i32 to f32
    %25 = vector.broadcast %24 : f32 to vector<1x256xf32>
    %26 = arith.minimumf %25, %23 : vector<1x256xf32>
    %cst_9 = arith.constant 1.000000e+00 : f32
    %27 = vector.broadcast %cst_9 : f32 to vector<1x256xf32>
    %28 = arith.addf %19, %27 : vector<1x256xf32>
    %cst_10 = arith.constant 0.000000e+00 : f32
    %c15_i32_11 = arith.constant 15 : i32
    %29 = vector.broadcast %cst_10 : f32 to vector<1x256xf32>
    %30 = arith.maximumf %29, %28 : vector<1x256xf32>
    %31 = arith.sitofp %c15_i32_11 : i32 to f32
    %32 = vector.broadcast %31 : f32 to vector<1x256xf32>
    %33 = arith.minimumf %32, %30 : vector<1x256xf32>
    %34 = arith.subf %4, %13 : vector<1x256xf32>
    %cst_12 = arith.constant 0.000000e+00 : f32
    %cst_13 = arith.constant 1.000000e+00 : f32
    %35 = vector.broadcast %cst_12 : f32 to vector<1x256xf32>
    %36 = arith.maximumf %35, %34 : vector<1x256xf32>
    %37 = vector.broadcast %cst_13 : f32 to vector<1x256xf32>
    %38 = arith.minimumf %37, %36 : vector<1x256xf32>
    %39 = arith.subf %7, %19 : vector<1x256xf32>
    %cst_14 = arith.constant 0.000000e+00 : f32
    %cst_15 = arith.constant 1.000000e+00 : f32
    %40 = vector.broadcast %cst_14 : f32 to vector<1x256xf32>
    %41 = arith.maximumf %40, %39 : vector<1x256xf32>
    %42 = vector.broadcast %cst_15 : f32 to vector<1x256xf32>
    %43 = arith.minimumf %42, %41 : vector<1x256xf32>
    %44 = tpu.iota {dimensions = array<i32: 0>} : vector<16x256xi32>
    %45 = arith.fptosi %13 : vector<1x256xf32> to vector<1x256xi32>
    %46 = vector.broadcast %45 : vector<1x256xi32> to vector<16x256xi32>
    %47 = arith.cmpi eq, %44, %46 : vector<16x256xi32>
    %cst_16 = arith.constant 1.000000e+00 : f32
    %48 = vector.broadcast %cst_16 : f32 to vector<1x256xf32>
    %49 = arith.subf %48, %38 : vector<1x256xf32>
    %cst_17 = arith.constant 0.000000e+00 : f32
    %50 = vector.shape_cast %49 : vector<1x256xf32> to vector<1x256xf32>
    %51 = vector.broadcast %50 : vector<1x256xf32> to vector<16x256xf32>
    %52 = vector.broadcast %cst_17 : f32 to vector<16x256xf32>
    %53 = arith.select %47, %51, %52 : vector<16x256xi1>, vector<16x256xf32>
    %54 = arith.fptosi %26 : vector<1x256xf32> to vector<1x256xi32>
    %55 = vector.broadcast %54 : vector<1x256xi32> to vector<16x256xi32>
    %56 = arith.cmpi eq, %44, %55 : vector<16x256xi32>
    %cst_18 = arith.constant 0.000000e+00 : f32
    %57 = vector.shape_cast %38 : vector<1x256xf32> to vector<1x256xf32>
    %58 = vector.broadcast %57 : vector<1x256xf32> to vector<16x256xf32>
    %59 = vector.broadcast %cst_18 : f32 to vector<16x256xf32>
    %60 = arith.select %56, %58, %59 : vector<16x256xi1>, vector<16x256xf32>
    %61 = arith.addf %53, %60 : vector<16x256xf32>
    %62 = arith.fptosi %19 : vector<1x256xf32> to vector<1x256xi32>
    %63 = vector.broadcast %62 : vector<1x256xi32> to vector<16x256xi32>
    %64 = arith.cmpi eq, %44, %63 : vector<16x256xi32>
    %cst_19 = arith.constant 1.000000e+00 : f32
    %65 = vector.broadcast %cst_19 : f32 to vector<1x256xf32>
    %66 = arith.subf %65, %43 : vector<1x256xf32>
    %cst_20 = arith.constant 0.000000e+00 : f32
    %67 = vector.shape_cast %66 : vector<1x256xf32> to vector<1x256xf32>
    %68 = vector.broadcast %67 : vector<1x256xf32> to vector<16x256xf32>
    %69 = vector.broadcast %cst_20 : f32 to vector<16x256xf32>
    %70 = arith.select %64, %68, %69 : vector<16x256xi1>, vector<16x256xf32>
    %71 = arith.fptosi %33 : vector<1x256xf32> to vector<1x256xi32>
    %72 = vector.broadcast %71 : vector<1x256xi32> to vector<16x256xi32>
    %73 = arith.cmpi eq, %44, %72 : vector<16x256xi32>
    %cst_21 = arith.constant 0.000000e+00 : f32
    %74 = vector.shape_cast %43 : vector<1x256xf32> to vector<1x256xf32>
    %75 = vector.broadcast %74 : vector<1x256xf32> to vector<16x256xf32>
    %76 = vector.broadcast %cst_21 : f32 to vector<16x256xf32>
    %77 = arith.select %73, %75, %76 : vector<16x256xi1>, vector<16x256xf32>
    %78 = arith.addf %70, %77 : vector<16x256xf32>
    %79 = vector.shape_cast %78 : vector<16x256xf32> to vector<16x1x256xf32>
    %80 = vector.shape_cast %61 : vector<16x256xf32> to vector<1x16x256xf32>
    %81 = vector.broadcast %79 : vector<16x1x256xf32> to vector<16x16x256xf32>
    %82 = vector.broadcast %80 : vector<1x16x256xf32> to vector<16x16x256xf32>
    %83 = arith.mulf %81, %82 : vector<16x16x256xf32>
    %84 = vector.shape_cast %83 : vector<16x16x256xf32> to vector<256x256xf32>
    %c0_22 = arith.constant 0 : index
    %c0_23 = arith.constant 0 : index
    %85 = vector.load %arg2[%c0_22, %c0_23] : memref<12x256xf32, #tpu.memory_space<vmem>>, vector<12x256xf32>
    %86 = arith.truncf %85 : vector<12x256xf32> to vector<12x256xbf16>
    %87 = arith.truncf %84 : vector<256x256xf32> to vector<256x256xbf16>
    %cst_24 = arith.constant dense<0.000000e+00> : vector<12x256xf32>
    %88 = tpu.matmul %86, %87, %cst_24 {dimension_numbers = #tpu.dot_dimension_numbers<[1], [0], [0], [1], [0, 0, 1, 1], [], []>} : vector<12x256xbf16>, vector<256x256xbf16>, vector<12x256xf32> -> vector<12x256xf32>
    %c0_25 = arith.constant 0 : index
    %c0_26 = arith.constant 0 : index
    %c0_27 = arith.constant 0 : index
    %89 = vector.load %arg3[%c0_25, %c0_26, %c0_27] : memref<1x3x256xf32, #tpu.memory_space<vmem>>, vector<1x3x256xf32>
    %90 = vector.shape_cast %89 : vector<1x3x256xf32> to vector<3x256xf32>
    %c0_28 = arith.constant 0 : index
    %c0_29 = arith.constant 0 : index
    %c0_30 = arith.constant 0 : index
    %91 = vector.load %arg4[%c0_28, %c0_29, %c0_30] : memref<1x3x1xf32, #tpu.memory_space<vmem>>, vector<1x3x1xf32>
    %92 = vector.shape_cast %91 : vector<1x3x1xf32> to vector<3x1xf32>
    %c0_31 = arith.constant 0 : index
    %c0_32 = arith.constant 0 : index
    %c0_33 = arith.constant 0 : index
    %93 = vector.load %arg5[%c0_31, %c0_32, %c0_33] : memref<1x3x1xf32, #tpu.memory_space<vmem>>, vector<1x3x1xf32>
    %94 = vector.shape_cast %93 : vector<1x3x1xf32> to vector<3x1xf32>
    %95 = vector.extract_strided_slice %88 {offsets = [0, 0], sizes = [3, 256], strides = [1, 1]} : vector<12x256xf32> to vector<3x256xf32>
    %c0_34 = arith.constant 0 : index
    %c0_35 = arith.constant 0 : index
    %c0_36 = arith.constant 0 : index
    %96 = vector.load %arg11[%c0_34, %c0_35, %c0_36] : memref<1x12x256xf32, #tpu.memory_space<vmem>>, vector<1x3x256xf32>
    %97 = vector.shape_cast %96 : vector<1x3x256xf32> to vector<3x256xf32>
    %98 = vector.shape_cast %95 : vector<3x256xf32> to vector<1x3x256xf32>
    tpu.vector_store %arg11[%c0_34, %c0_35, %c0_36], %98 {strides = array<i32>} : memref<1x12x256xf32, #tpu.memory_space<vmem>>, vector<1x3x256xf32>,
    %99 = vector.extract_strided_slice %88 {offsets = [3, 0], sizes = [3, 256], strides = [1, 1]} : vector<12x256xf32> to vector<3x256xf32>
    %100 = arith.mulf %99, %90 : vector<3x256xf32>
    %c0_37 = arith.constant 0 : index
    %c3 = arith.constant 3 : index
    %c0_38 = arith.constant 0 : index
    %101 = vector.load %arg11[%c0_37, %c3, %c0_38] : memref<1x12x256xf32, #tpu.memory_space<vmem>>, vector<1x3x256xf32>
    %102 = vector.shape_cast %101 : vector<1x3x256xf32> to vector<3x256xf32>
    %103 = vector.shape_cast %100 : vector<3x256xf32> to vector<1x3x256xf32>
    tpu.vector_store %arg11[%c0_37, %c3, %c0_38], %103 {strides = array<i32>} : memref<1x12x256xf32, #tpu.memory_space<vmem>>, vector<1x3x256xf32>,
    %104 = vector.extract_strided_slice %88 {offsets = [6, 0], sizes = [3, 256], strides = [1, 1]} : vector<12x256xf32> to vector<3x256xf32>
    %105 = vector.broadcast %92 : vector<3x1xf32> to vector<3x256xf32>
    %106 = arith.mulf %104, %105 : vector<3x256xf32>
    %c0_39 = arith.constant 0 : index
    %c6 = arith.constant 6 : index
    %c0_40 = arith.constant 0 : index
    %107 = vector.load %arg11[%c0_39, %c6, %c0_40] : memref<1x12x256xf32, #tpu.memory_space<vmem>>, vector<1x3x256xf32>
    %108 = vector.shape_cast %107 : vector<1x3x256xf32> to vector<3x256xf32>
    %109 = vector.shape_cast %106 : vector<3x256xf32> to vector<1x3x256xf32>
    tpu.vector_store %arg11[%c0_39, %c6, %c0_40], %109 {strides = array<i32>} : memref<1x12x256xf32, #tpu.memory_space<vmem>>, vector<1x3x256xf32>,
    %110 = vector.extract_strided_slice %88 {offsets = [9, 0], sizes = [3, 256], strides = [1, 1]} : vector<12x256xf32> to vector<3x256xf32>
    %111 = vector.broadcast %94 : vector<3x1xf32> to vector<3x256xf32>
    %112 = arith.mulf %110, %111 : vector<3x256xf32>
    %c0_41 = arith.constant 0 : index
    %c9 = arith.constant 9 : index
    %c0_42 = arith.constant 0 : index
    %113 = vector.load %arg11[%c0_41, %c9, %c0_42] : memref<1x12x256xf32, #tpu.memory_space<vmem>>, vector<1x3x256xf32>
    %114 = vector.shape_cast %113 : vector<1x3x256xf32> to vector<3x256xf32>
    %115 = vector.shape_cast %112 : vector<3x256xf32> to vector<1x3x256xf32>
    tpu.vector_store %arg11[%c0_41, %c9, %c0_42], %115 {strides = array<i32>} : memref<1x12x256xf32, #tpu.memory_space<vmem>>, vector<1x3x256xf32>,
    %c0_43 = arith.constant 0 : index
    %c0_44 = arith.constant 0 : index
    %c0_45 = arith.constant 0 : index
    %116 = vector.load %arg11[%c0_43, %c0_44, %c0_45] : memref<1x12x256xf32, #tpu.memory_space<vmem>>, vector<1x12x256xf32>
    %117 = vector.shape_cast %116 : vector<1x12x256xf32> to vector<12x256xf32>
    %c0_46 = arith.constant 0 : index
    %c0_47 = arith.constant 0 : index
    %118 = vector.load %arg6[%c0_46, %c0_47] : memref<9x256xf32, #tpu.memory_space<vmem>>, vector<9x256xf32>
    %c0_48 = arith.constant 0 : index
    %c0_49 = arith.constant 0 : index
    %119 = vector.load %arg7[%c0_48, %c0_49] : memref<16x108xf32, #tpu.memory_space<vmem>>, vector<16x108xf32>
    %120 = arith.truncf %119 : vector<16x108xf32> to vector<16x108xbf16>
    %121 = vector.extract_strided_slice %117 {offsets = [0, 239], sizes = [12, 17], strides = [1, 1]} : vector<12x256xf32> to vector<12x17xf32>
    %122 = vector.extract_strided_slice %117 {offsets = [0, 0], sizes = [12, 239], strides = [1, 1]} : vector<12x256xf32> to vector<12x239xf32>
    %123 = tpu.concatenate %121, %122 in 1 : vector<12x17xf32>, vector<12x239xf32> -> vector<12x256xf32>
    %124 = vector.extract_strided_slice %118 {offsets = [0, 0], sizes = [1, 256], strides = [1, 1]} : vector<9x256xf32> to vector<1x256xf32>
    %125 = vector.broadcast %124 : vector<1x256xf32> to vector<12x256xf32>
    %126 = arith.mulf %123, %125 : vector<12x256xf32>
    %127 = vector.extract_strided_slice %117 {offsets = [0, 240], sizes = [12, 16], strides = [1, 1]} : vector<12x256xf32> to vector<12x16xf32>
    %128 = vector.extract_strided_slice %117 {offsets = [0, 0], sizes = [12, 240], strides = [1, 1]} : vector<12x256xf32> to vector<12x240xf32>
    %129 = tpu.concatenate %127, %128 in 1 : vector<12x16xf32>, vector<12x240xf32> -> vector<12x256xf32>
    %130 = vector.extract_strided_slice %118 {offsets = [1, 0], sizes = [1, 256], strides = [1, 1]} : vector<9x256xf32> to vector<1x256xf32>
    %131 = vector.broadcast %130 : vector<1x256xf32> to vector<12x256xf32>
    %132 = arith.mulf %129, %131 : vector<12x256xf32>
    %133 = vector.extract_strided_slice %117 {offsets = [0, 241], sizes = [12, 15], strides = [1, 1]} : vector<12x256xf32> to vector<12x15xf32>
    %134 = vector.extract_strided_slice %117 {offsets = [0, 0], sizes = [12, 241], strides = [1, 1]} : vector<12x256xf32> to vector<12x241xf32>
    %135 = tpu.concatenate %133, %134 in 1 : vector<12x15xf32>, vector<12x241xf32> -> vector<12x256xf32>
    %136 = vector.extract_strided_slice %118 {offsets = [2, 0], sizes = [1, 256], strides = [1, 1]} : vector<9x256xf32> to vector<1x256xf32>
    %137 = vector.broadcast %136 : vector<1x256xf32> to vector<12x256xf32>
    %138 = arith.mulf %135, %137 : vector<12x256xf32>
    %139 = vector.extract_strided_slice %117 {offsets = [0, 255], sizes = [12, 1], strides = [1, 1]} : vector<12x256xf32> to vector<12x1xf32>
    %140 = vector.extract_strided_slice %117 {offsets = [0, 0], sizes = [12, 255], strides = [1, 1]} : vector<12x256xf32> to vector<12x255xf32>
    %141 = tpu.concatenate %139, %140 in 1 : vector<12x1xf32>, vector<12x255xf32> -> vector<12x256xf32>
    %142 = vector.extract_strided_slice %118 {offsets = [3, 0], sizes = [1, 256], strides = [1, 1]} : vector<9x256xf32> to vector<1x256xf32>
    %143 = vector.broadcast %142 : vector<1x256xf32> to vector<12x256xf32>
    %144 = arith.mulf %141, %143 : vector<12x256xf32>
    %145 = vector.extract_strided_slice %118 {offsets = [4, 0], sizes = [1, 256], strides = [1, 1]} : vector<9x256xf32> to vector<1x256xf32>
    %146 = vector.broadcast %145 : vector<1x256xf32> to vector<12x256xf32>
    %147 = arith.mulf %117, %146 : vector<12x256xf32>
    %148 = vector.extract_strided_slice %117 {offsets = [0, 1], sizes = [12, 255], strides = [1, 1]} : vector<12x256xf32> to vector<12x255xf32>
    %149 = vector.extract_strided_slice %117 {offsets = [0, 0], sizes = [12, 1], strides = [1, 1]} : vector<12x256xf32> to vector<12x1xf32>
    %150 = tpu.concatenate %148, %149 in 1 : vector<12x255xf32>, vector<12x1xf32> -> vector<12x256xf32>
    %151 = vector.extract_strided_slice %118 {offsets = [5, 0], sizes = [1, 256], strides = [1, 1]} : vector<9x256xf32> to vector<1x256xf32>
    %152 = vector.broadcast %151 : vector<1x256xf32> to vector<12x256xf32>
    %153 = arith.mulf %150, %152 : vector<12x256xf32>
    %154 = vector.extract_strided_slice %117 {offsets = [0, 15], sizes = [12, 241], strides = [1, 1]} : vector<12x256xf32> to vector<12x241xf32>
    %155 = vector.extract_strided_slice %117 {offsets = [0, 0], sizes = [12, 15], strides = [1, 1]} : vector<12x256xf32> to vector<12x15xf32>
    %156 = tpu.concatenate %154, %155 in 1 : vector<12x241xf32>, vector<12x15xf32> -> vector<12x256xf32>
    %157 = vector.extract_strided_slice %118 {offsets = [6, 0], sizes = [1, 256], strides = [1, 1]} : vector<9x256xf32> to vector<1x256xf32>
    %158 = vector.broadcast %157 : vector<1x256xf32> to vector<12x256xf32>
    %159 = arith.mulf %156, %158 : vector<12x256xf32>
    %160 = vector.extract_strided_slice %117 {offsets = [0, 16], sizes = [12, 240], strides = [1, 1]} : vector<12x256xf32> to vector<12x240xf32>
    %161 = vector.extract_strided_slice %117 {offsets = [0, 0], sizes = [12, 16], strides = [1, 1]} : vector<12x256xf32> to vector<12x16xf32>
    %162 = tpu.concatenate %160, %161 in 1 : vector<12x240xf32>, vector<12x16xf32> -> vector<12x256xf32>
    %163 = vector.extract_strided_slice %118 {offsets = [7, 0], sizes = [1, 256], strides = [1, 1]} : vector<9x256xf32> to vector<1x256xf32>
    %164 = vector.broadcast %163 : vector<1x256xf32> to vector<12x256xf32>
    %165 = arith.mulf %162, %164 : vector<12x256xf32>
    %166 = vector.extract_strided_slice %117 {offsets = [0, 17], sizes = [12, 239], strides = [1, 1]} : vector<12x256xf32> to vector<12x239xf32>
    %167 = vector.extract_strided_slice %117 {offsets = [0, 0], sizes = [12, 17], strides = [1, 1]} : vector<12x256xf32> to vector<12x17xf32>
    %168 = tpu.concatenate %166, %167 in 1 : vector<12x239xf32>, vector<12x17xf32> -> vector<12x256xf32>
    %169 = vector.extract_strided_slice %118 {offsets = [8, 0], sizes = [1, 256], strides = [1, 1]} : vector<9x256xf32> to vector<1x256xf32>
    %170 = vector.broadcast %169 : vector<1x256xf32> to vector<12x256xf32>
    %171 = arith.mulf %168, %170 : vector<12x256xf32>
    %172 = tpu.concatenate %126, %132, %138, %144, %147, %153, %159, %165, %171 in 0 : vector<12x256xf32>, vector<12x256xf32>, vector<12x256xf32>, vector<12x256xf32>, vector<12x256xf32>, vector<12x256xf32>, vector<12x256xf32>, vector<12x256xf32>, vector<12x256xf32> -> vector<108x256xf32>
    %173 = arith.truncf %172 : vector<108x256xf32> to vector<108x256xbf16>
    %cst_50 = arith.constant dense<0.000000e+00> : vector<16x256xf32>
    %174 = tpu.matmul %120, %173, %cst_50 {dimension_numbers = #tpu.dot_dimension_numbers<[1], [0], [0], [1], [0, 0, 1, 1], [], []>} : vector<16x108xbf16>, vector<108x256xbf16>, vector<16x256xf32> -> vector<16x256xf32>
    %c0_51 = arith.constant 0 : index
    %c0_52 = arith.constant 0 : index
    %175 = vector.load %arg8[%c0_51, %c0_52] : memref<16x1xf32, #tpu.memory_space<vmem>>, vector<16x1xf32>
    %176 = vector.broadcast %175 : vector<16x1xf32> to vector<16x256xf32>
    %177 = arith.addf %174, %176 : vector<16x256xf32>
    %cst_53 = arith.constant 0.000000e+00 : f32
    %178 = vector.broadcast %cst_53 : f32 to vector<16x256xf32>
    %179 = arith.maximumf %177, %178 : vector<16x256xf32>
    %c0_54 = arith.constant 0 : index
    %c0_55 = arith.constant 0 : index
    %180 = vector.load %arg9[%c0_54, %c0_55] : memref<3x144xf32, #tpu.memory_space<vmem>>, vector<3x144xf32>
    %181 = arith.truncf %180 : vector<3x144xf32> to vector<3x144xbf16>
    %182 = vector.extract_strided_slice %179 {offsets = [0, 239], sizes = [16, 17], strides = [1, 1]} : vector<16x256xf32> to vector<16x17xf32>
    %183 = vector.extract_strided_slice %179 {offsets = [0, 0], sizes = [16, 239], strides = [1, 1]} : vector<16x256xf32> to vector<16x239xf32>
    %184 = tpu.concatenate %182, %183 in 1 : vector<16x17xf32>, vector<16x239xf32> -> vector<16x256xf32>
    %185 = vector.extract_strided_slice %118 {offsets = [0, 0], sizes = [1, 256], strides = [1, 1]} : vector<9x256xf32> to vector<1x256xf32>
    %186 = vector.broadcast %185 : vector<1x256xf32> to vector<16x256xf32>
    %187 = arith.mulf %184, %186 : vector<16x256xf32>
    %188 = vector.extract_strided_slice %179 {offsets = [0, 240], sizes = [16, 16], strides = [1, 1]} : vector<16x256xf32> to vector<16x16xf32>
    %189 = vector.extract_strided_slice %179 {offsets = [0, 0], sizes = [16, 240], strides = [1, 1]} : vector<16x256xf32> to vector<16x240xf32>
    %190 = tpu.concatenate %188, %189 in 1 : vector<16x16xf32>, vector<16x240xf32> -> vector<16x256xf32>
    %191 = vector.extract_strided_slice %118 {offsets = [1, 0], sizes = [1, 256], strides = [1, 1]} : vector<9x256xf32> to vector<1x256xf32>
    %192 = vector.broadcast %191 : vector<1x256xf32> to vector<16x256xf32>
    %193 = arith.mulf %190, %192 : vector<16x256xf32>
    %194 = vector.extract_strided_slice %179 {offsets = [0, 241], sizes = [16, 15], strides = [1, 1]} : vector<16x256xf32> to vector<16x15xf32>
    %195 = vector.extract_strided_slice %179 {offsets = [0, 0], sizes = [16, 241], strides = [1, 1]} : vector<16x256xf32> to vector<16x241xf32>
    %196 = tpu.concatenate %194, %195 in 1 : vector<16x15xf32>, vector<16x241xf32> -> vector<16x256xf32>
    %197 = vector.extract_strided_slice %118 {offsets = [2, 0], sizes = [1, 256], strides = [1, 1]} : vector<9x256xf32> to vector<1x256xf32>
    %198 = vector.broadcast %197 : vector<1x256xf32> to vector<16x256xf32>
    %199 = arith.mulf %196, %198 : vector<16x256xf32>
    %200 = vector.extract_strided_slice %179 {offsets = [0, 255], sizes = [16, 1], strides = [1, 1]} : vector<16x256xf32> to vector<16x1xf32>
    %201 = vector.extract_strided_slice %179 {offsets = [0, 0], sizes = [16, 255], strides = [1, 1]} : vector<16x256xf32> to vector<16x255xf32>
    %202 = tpu.concatenate %200, %201 in 1 : vector<16x1xf32>, vector<16x255xf32> -> vector<16x256xf32>
    %203 = vector.extract_strided_slice %118 {offsets = [3, 0], sizes = [1, 256], strides = [1, 1]} : vector<9x256xf32> to vector<1x256xf32>
    %204 = vector.broadcast %203 : vector<1x256xf32> to vector<16x256xf32>
    %205 = arith.mulf %202, %204 : vector<16x256xf32>
    %206 = vector.extract_strided_slice %118 {offsets = [4, 0], sizes = [1, 256], strides = [1, 1]} : vector<9x256xf32> to vector<1x256xf32>
    %207 = vector.broadcast %206 : vector<1x256xf32> to vector<16x256xf32>
    %208 = arith.mulf %179, %207 : vector<16x256xf32>
    %209 = vector.extract_strided_slice %179 {offsets = [0, 1], sizes = [16, 255], strides = [1, 1]} : vector<16x256xf32> to vector<16x255xf32>
    %210 = vector.extract_strided_slice %179 {offsets = [0, 0], sizes = [16, 1], strides = [1, 1]} : vector<16x256xf32> to vector<16x1xf32>
    %211 = tpu.concatenate %209, %210 in 1 : vector<16x255xf32>, vector<16x1xf32> -> vector<16x256xf32>
    %212 = vector.extract_strided_slice %118 {offsets = [5, 0], sizes = [1, 256], strides = [1, 1]} : vector<9x256xf32> to vector<1x256xf32>
    %213 = vector.broadcast %212 : vector<1x256xf32> to vector<16x256xf32>
    %214 = arith.mulf %211, %213 : vector<16x256xf32>
    %215 = vector.extract_strided_slice %179 {offsets = [0, 15], sizes = [16, 241], strides = [1, 1]} : vector<16x256xf32> to vector<16x241xf32>
    %216 = vector.extract_strided_slice %179 {offsets = [0, 0], sizes = [16, 15], strides = [1, 1]} : vector<16x256xf32> to vector<16x15xf32>
    %217 = tpu.concatenate %215, %216 in 1 : vector<16x241xf32>, vector<16x15xf32> -> vector<16x256xf32>
    %218 = vector.extract_strided_slice %118 {offsets = [6, 0], sizes = [1, 256], strides = [1, 1]} : vector<9x256xf32> to vector<1x256xf32>
    %219 = vector.broadcast %218 : vector<1x256xf32> to vector<16x256xf32>
    %220 = arith.mulf %217, %219 : vector<16x256xf32>
    %221 = vector.extract_strided_slice %179 {offsets = [0, 16], sizes = [16, 240], strides = [1, 1]} : vector<16x256xf32> to vector<16x240xf32>
    %222 = vector.extract_strided_slice %179 {offsets = [0, 0], sizes = [16, 16], strides = [1, 1]} : vector<16x256xf32> to vector<16x16xf32>
    %223 = tpu.concatenate %221, %222 in 1 : vector<16x240xf32>, vector<16x16xf32> -> vector<16x256xf32>
    %224 = vector.extract_strided_slice %118 {offsets = [7, 0], sizes = [1, 256], strides = [1, 1]} : vector<9x256xf32> to vector<1x256xf32>
    %225 = vector.broadcast %224 : vector<1x256xf32> to vector<16x256xf32>
    %226 = arith.mulf %223, %225 : vector<16x256xf32>
    %227 = vector.extract_strided_slice %179 {offsets = [0, 17], sizes = [16, 239], strides = [1, 1]} : vector<16x256xf32> to vector<16x239xf32>
    %228 = vector.extract_strided_slice %179 {offsets = [0, 0], sizes = [16, 17], strides = [1, 1]} : vector<16x256xf32> to vector<16x17xf32>
    %229 = tpu.concatenate %227, %228 in 1 : vector<16x239xf32>, vector<16x17xf32> -> vector<16x256xf32>
    %230 = vector.extract_strided_slice %118 {offsets = [8, 0], sizes = [1, 256], strides = [1, 1]} : vector<9x256xf32> to vector<1x256xf32>
    %231 = vector.broadcast %230 : vector<1x256xf32> to vector<16x256xf32>
    %232 = arith.mulf %229, %231 : vector<16x256xf32>
    %233 = tpu.concatenate %187, %193, %199, %205, %208, %214, %220, %226, %232 in 0 : vector<16x256xf32>, vector<16x256xf32>, vector<16x256xf32>, vector<16x256xf32>, vector<16x256xf32>, vector<16x256xf32>, vector<16x256xf32>, vector<16x256xf32>, vector<16x256xf32> -> vector<144x256xf32>
    %234 = arith.truncf %233 : vector<144x256xf32> to vector<144x256xbf16>
    %cst_56 = arith.constant dense<0.000000e+00> : vector<3x256xf32>
    %235 = tpu.matmul %181, %234, %cst_56 {dimension_numbers = #tpu.dot_dimension_numbers<[1], [0], [0], [1], [0, 0, 1, 1], [], []>} : vector<3x144xbf16>, vector<144x256xbf16>, vector<3x256xf32> -> vector<3x256xf32>
    %c0_57 = arith.constant 0 : index
    %c0_58 = arith.constant 0 : index
    %236 = vector.load %arg10[%c0_57, %c0_58] : memref<3x1xf32, #tpu.memory_space<vmem>>, vector<3x1xf32>
    %237 = vector.broadcast %236 : vector<3x1xf32> to vector<3x256xf32>
    %238 = arith.addf %235, %237 : vector<3x256xf32>
    %239 = math.tanh %238 : vector<3x256xf32>
    %c0_59 = arith.constant 0 : index
    %c0_60 = arith.constant 0 : index
    %c0_61 = arith.constant 0 : index
    %240 = vector.load %arg12[%c0_59, %c0_60, %c0_61] : memref<1x3x256xf32, #tpu.memory_space<vmem>>, vector<1x3x256xf32>
    %241 = vector.shape_cast %240 : vector<1x3x256xf32> to vector<3x256xf32>
    %242 = vector.shape_cast %239 : vector<3x256xf32> to vector<1x3x256xf32>
    tpu.vector_store %arg12[%c0_59, %c0_60, %c0_61], %242 {strides = array<i32>} : memref<1x3x256xf32, #tpu.memory_space<vmem>>, vector<1x3x256xf32>,
    return
  }
  func.func @transform_0(%arg0: i32) -> (i32, i32, i32) {
    %c0_i32 = arith.constant 0 : i32
    %c0_i32_0 = arith.constant 0 : i32
    %c0_i32_1 = arith.constant 0 : i32
    return %arg0, %c0_i32, %c0_i32_0 : i32, i32, i32
  }
  func.func @transform_1(%arg0: i32) -> (i32, i32) {
    %c0_i32 = arith.constant 0 : i32
    %c0_i32_0 = arith.constant 0 : i32
    %c0_i32_1 = arith.constant 0 : i32
    return %c0_i32, %c0_i32_0 : i32, i32
  }
  func.func @transform_2(%arg0: i32) -> (i32, i32, i32) {
    %c0_i32 = arith.constant 0 : i32
    %c0_i32_0 = arith.constant 0 : i32
    %c0_i32_1 = arith.constant 0 : i32
    return %arg0, %c0_i32, %c0_i32_0 : i32, i32, i32
  }
  func.func @transform_3(%arg0: i32) -> (i32, i32, i32) {
    %c0_i32 = arith.constant 0 : i32
    %c0_i32_0 = arith.constant 0 : i32
    %c0_i32_1 = arith.constant 0 : i32
    return %arg0, %c0_i32, %c0_i32_0 : i32, i32, i32
  }
  func.func @transform_4(%arg0: i32) -> (i32, i32, i32) {
    %c0_i32 = arith.constant 0 : i32
    %c0_i32_0 = arith.constant 0 : i32
    %c0_i32_1 = arith.constant 0 : i32
    return %arg0, %c0_i32, %c0_i32_0 : i32, i32, i32
  }
  func.func @transform_5(%arg0: i32) -> (i32, i32) {
    %c0_i32 = arith.constant 0 : i32
    %c0_i32_0 = arith.constant 0 : i32
    %c0_i32_1 = arith.constant 0 : i32
    return %c0_i32, %c0_i32_0 : i32, i32
  }
  func.func @transform_6(%arg0: i32) -> (i32, i32) {
    %c0_i32 = arith.constant 0 : i32
    %c0_i32_0 = arith.constant 0 : i32
    %c0_i32_1 = arith.constant 0 : i32
    return %c0_i32, %c0_i32_0 : i32, i32
  }
  func.func @transform_7(%arg0: i32) -> (i32, i32) {
    %c0_i32 = arith.constant 0 : i32
    %c0_i32_0 = arith.constant 0 : i32
    %c0_i32_1 = arith.constant 0 : i32
    return %c0_i32, %c0_i32_0 : i32, i32
  }
  func.func @transform_8(%arg0: i32) -> (i32, i32) {
    %c0_i32 = arith.constant 0 : i32
    %c0_i32_0 = arith.constant 0 : i32
    %c0_i32_1 = arith.constant 0 : i32
    return %c0_i32, %c0_i32_0 : i32, i32
  }
  func.func @transform_9(%arg0: i32) -> (i32, i32) {
    %c0_i32 = arith.constant 0 : i32
    %c0_i32_0 = arith.constant 0 : i32
    %c0_i32_1 = arith.constant 0 : i32
    return %c0_i32, %c0_i32_0 : i32, i32
  }
  func.func @transform_10(%arg0: i32) -> (i32, i32, i32) {
    %c0_i32 = arith.constant 0 : i32
    %c0_i32_0 = arith.constant 0 : i32
    %c0_i32_1 = arith.constant 0 : i32
    return %arg0, %c0_i32, %c0_i32_0 : i32, i32, i32
  }
  func.func @transform_11(%arg0: i32) -> (i32, i32, i32) {
    %c0_i32 = arith.constant 0 : i32
    %c0_i32_0 = arith.constant 0 : i32
    %c0_i32_1 = arith.constant 0 : i32
    return %arg0, %c0_i32, %c0_i32_0 : i32, i32, i32
  }
}

</mosaic_0001>

<llo_original>
// kernel: tpu_custom_call.1
$region0: #{tpu_custom_call.1}
  #allocation0 [shape = 'u32[]', space=smem, size = 0x4, offset = 0x4, fixed_abs, tag = 'smem constant byte address 0x4 - core index']
  #allocation1 [shape = 'u32[144,128]{1,0:T(1,128)}', space=vmem, size = 0x12000, scoped, tag = 'internal scratch']
  %s0 = inlined_call_operand.hbm [shape: f32[2,2,256], index: 0, kind: input, shape index: {}]
  %s1 = inlined_call_operand.vmem [shape: f32[12,256], index: 1, kind: input, shape index: {}]
  %s2 = inlined_call_operand.vmem [shape: f32[2,3,256], index: 2, kind: input, shape index: {}]
  %s3 = inlined_call_operand.vmem [shape: f32[2,3,1], index: 3, kind: input, shape index: {}]
  %s4 = inlined_call_operand.vmem [shape: f32[2,3,1], index: 4, kind: input, shape index: {}]
  %s5 = inlined_call_operand.vmem [shape: f32[9,256], index: 5, kind: input, shape index: {}]
  %s6 = inlined_call_operand.vmem [shape: f32[16,108], index: 6, kind: input, shape index: {}]
  %s7 = inlined_call_operand.vmem [shape: f32[16,1], index: 7, kind: input, shape index: {}]
  %s8 = inlined_call_operand.vmem [shape: f32[3,144], index: 8, kind: input, shape index: {}]
  %s9 = inlined_call_operand.vmem [shape: f32[3,1], index: 9, kind: input, shape index: {}]
  %s10 = inlined_call_operand.vmem [shape: f32[2,12,256], index: 10, kind: output, shape index: {0}]
  %s11 = inlined_call_operand.vmem [shape: f32[2,3,256], index: 11, kind: output, shape index: {1}]
  %12 = xla_tuple %s10, %s11
  %s13 = sld [smem:[#allocation0]]
  $region85: #{tpu_custom_call.1} parent=0
    _
  %s15 = ssub.s32 1, %s13
  %s16 = scalar_select 0, %s15, %s13
  $region1: #{tpu_custom_call.1} parent=0
    #allocation2 [shape = 'u8[4096]{0}', space=vmem, size = 0x1000, scoped, tag = 'input window, operand 0']
    #allocation3 [shape = 's32[2]{0}', space=sflag, size = 0x8, scoped, tag = 'scoped memory for tpu_custom_call.1']
    %17 = vsyncpa [#allocation3], 0
    %s18 = scalar_lea.sflag [#allocation3], 1
    %19 = vsyncpa %s18, 0
    loop: start=0, step=1, limit=4
    $region2: #{tpu_custom_call.1} parent=1 // loop_pre_header
      _
    $region3: #{tpu_custom_call.1} parent=1 // loop_header
      %s21 = sphi 0, %s25
      %p22 = scmp.ge.s32.totalorder %s21, 4
      %s31 = sphi 0, %s33
      %s34 = sphi 0, %s31
      %s35 = sphi 0, %s34
      %s51 = sphi 0, %s35
      %s55 = sphi 0, %s55
      %s57 = sphi 0, %s55
      %s58 = sphi 0, %s57
      %s72 = sphi 0, %s58
      %s78 = sphi 0, %s80
      %s81 = sphi 0, %s78
      %s82 = sphi 0, %s81
      %s98 = sphi 0, %s82
      %s104 = sphi 0, %s106
      %s107 = sphi 0, %s104
      %s108 = sphi 0, %s107
      %s124 = sphi 0, %s108
      %s130 = sphi 0, %s132
      %s133 = sphi 0, %s130
      %s134 = sphi 0, %s133
      %s150 = sphi 0, %s134
      %s154 = sphi 0, %s154
      %s156 = sphi 0, %s154
      %s157 = sphi 0, %s156
      %s171 = sphi 0, %s157
      %s175 = sphi 0, %s175
      %s177 = sphi 0, %s175
      %s178 = sphi 0, %s177
      %s192 = sphi 0, %s178
      %s196 = sphi 0, %s196
      %s198 = sphi 0, %s196
      %s199 = sphi 0, %s198
      %s213 = sphi 0, %s199
      %s217 = sphi 0, %s217
      %s219 = sphi 0, %s217
      %s220 = sphi 0, %s219
      %s234 = sphi 0, %s220
      %s238 = sphi 0, %s238
      %s240 = sphi 0, %s238
      %s241 = sphi 0, %s240
      %s255 = sphi 0, %s241
      %s261 = sphi 0, %s263
      %s264 = sphi 0, %s261
      %s265 = sphi 0, %s264
      %s281 = sphi 0, %s265
      %s287 = sphi 0, %s289
      %s290 = sphi 0, %s287
      %s291 = sphi 0, %s290
      %s307 = sphi 0, %s291
    $region4: #{tpu_custom_call.1} parent=1 // loop_header_branch
      %24 = sbr.rel (%p22) target = $region8
    $region5: #{tpu_custom_call.1} parent=1 // loop_body
      %s26 = ssub.s32 %s21, 1
      %s27 = ssub.s32 %s21, 2
      %s28 = sadd.s32 %s21, 1
      %s29 = ssub.s32 %s21, %s28
      %p30 = scmp.eq.s32.totalorder %s29, 0
      %s32 = sadd.s32 %s31, 1
      %s33 = scalar_select %p30, %s31, %s32
      %p36 = pneg %p30
      %p37 = scmp.eq.s32.totalorder %s21, 1
      %p38 = por %p36, %p37
      %p39 = scmp.ne.s32.totalorder %s31, %s34
      %p40 = scmp.eq.s32.totalorder %s21, 0
      %p41 = por %p39, %p40
      %p42 = scmp.ne.s32.totalorder %s31, %s34
      %p43 = scmp.eq.s32.totalorder %s26, 1
      %p44 = por %p42, %p43
      %p45 = scmp.ne.s32.totalorder %s34, %s35
      %p46 = scmp.eq.s32.totalorder %s26, 0
      %p47 = por %p45, %p46
      %p48 = scmp.ne.s32.totalorder %s34, %s35
      %p49 = scmp.eq.s32.totalorder %s27, 1
      %p50 = por %p48, %p49
      %p52 = scmp.ne.s32.totalorder %s35, %s51
      %p53 = scmp.eq.s32.totalorder %s27, 0
      %p54 = por %p52, %p53
      %s56 = sadd.s32 %s55, 1
      %p59 = scmp.eq.s32.totalorder %s21, 1
      %p60 = scmp.ne.s32.totalorder %s55, %s57
      %p61 = scmp.eq.s32.totalorder %s21, 0
      %p62 = por %p60, %p61
      %p63 = scmp.ne.s32.totalorder %s55, %s57
      %p64 = scmp.eq.s32.totalorder %s26, 1
      %p65 = por %p63, %p64
      %p66 = scmp.ne.s32.totalorder %s57, %s58
      %p67 = scmp.eq.s32.totalorder %s26, 0
      %p68 = por %p66, %p67
      %p69 = scmp.ne.s32.totalorder %s57, %s58
      %p70 = scmp.eq.s32.totalorder %s27, 1
      %p71 = por %p69, %p70
      %p73 = scmp.ne.s32.totalorder %s58, %s72
      %p74 = scmp.eq.s32.totalorder %s27, 0
      %p75 = por %p73, %p74
      %s76 = ssub.s32 %s21, %s28
      %p77 = scmp.eq.s32.totalorder %s76, 0
      %s79 = sadd.s32 %s78, 1
      %s80 = scalar_select %p77, %s78, %s79
      %p83 = pneg %p77
      %p84 = scmp.eq.s32.totalorder %s21, 1
      %p85 = por %p83, %p84
      %p86 = scmp.ne.s32.totalorder %s78, %s81
      %p87 = scmp.eq.s32.totalorder %s21, 0
      %p88 = por %p86, %p87
      %p89 = scmp.ne.s32.totalorder %s78, %s81
      %p90 = scmp.eq.s32.totalorder %s26, 1
      %p91 = por %p89, %p90
      %p92 = scmp.ne.s32.totalorder %s81, %s82
      %p93 = scmp.eq.s32.totalorder %s26, 0
      %p94 = por %p92, %p93
      %p95 = scmp.ne.s32.totalorder %s81, %s82
      %p96 = scmp.eq.s32.totalorder %s27, 1
      %p97 = por %p95, %p96
      %p99 = scmp.ne.s32.totalorder %s82, %s98
      %p100 = scmp.eq.s32.totalorder %s27, 0
      %p101 = por %p99, %p100
      %s102 = ssub.s32 %s21, %s28
      %p103 = scmp.eq.s32.totalorder %s102, 0
      %s105 = sadd.s32 %s104, 1
      %s106 = scalar_select %p103, %s104, %s105
      %p109 = pneg %p103
      %p110 = scmp.eq.s32.totalorder %s21, 1
      %p111 = por %p109, %p110
      %p112 = scmp.ne.s32.totalorder %s104, %s107
      %p113 = scmp.eq.s32.totalorder %s21, 0
      %p114 = por %p112, %p113
      %p115 = scmp.ne.s32.totalorder %s104, %s107
      %p116 = scmp.eq.s32.totalorder %s26, 1
      %p117 = por %p115, %p116
      %p118 = scmp.ne.s32.totalorder %s107, %s108
      %p119 = scmp.eq.s32.totalorder %s26, 0
      %p120 = por %p118, %p119
      %p121 = scmp.ne.s32.totalorder %s107, %s108
      %p122 = scmp.eq.s32.totalorder %s27, 1
      %p123 = por %p121, %p122
      %p125 = scmp.ne.s32.totalorder %s108, %s124
      %p126 = scmp.eq.s32.totalorder %s27, 0
      %p127 = por %p125, %p126
      %s128 = ssub.s32 %s21, %s28
      %p129 = scmp.eq.s32.totalorder %s128, 0
      %s131 = sadd.s32 %s130, 1
      %s132 = scalar_select %p129, %s130, %s131
      %p135 = pneg %p129
      %p136 = scmp.eq.s32.totalorder %s21, 1
      %p137 = por %p135, %p136
      %p138 = scmp.ne.s32.totalorder %s130, %s133
      %p139 = scmp.eq.s32.totalorder %s21, 0
      %p140 = por %p138, %p139
      %p141 = scmp.ne.s32.totalorder %s130, %s133
      %p142 = scmp.eq.s32.totalorder %s26, 1
      %p143 = por %p141, %p142
      %p144 = scmp.ne.s32.totalorder %s133, %s134
      %p145 = scmp.eq.s32.totalorder %s26, 0
      %p146 = por %p144, %p145
      %p147 = scmp.ne.s32.totalorder %s133, %s134
      %p148 = scmp.eq.s32.totalorder %s27, 1
      %p149 = por %p147, %p148
      %p151 = scmp.ne.s32.totalorder %s134, %s150
      %p152 = scmp.eq.s32.totalorder %s27, 0
      %p153 = por %p151, %p152
      %s155 = sadd.s32 %s154, 1
      %p158 = scmp.eq.s32.totalorder %s21, 1
      %p159 = scmp.ne.s32.totalorder %s154, %s156
      %p160 = scmp.eq.s32.totalorder %s21, 0
      %p161 = por %p159, %p160
      %p162 = scmp.ne.s32.totalorder %s154, %s156
      %p163 = scmp.eq.s32.totalorder %s26, 1
      %p164 = por %p162, %p163
      %p165 = scmp.ne.s32.totalorder %s156, %s157
      %p166 = scmp.eq.s32.totalorder %s26, 0
      %p167 = por %p165, %p166
      %p168 = scmp.ne.s32.totalorder %s156, %s157
      %p169 = scmp.eq.s32.totalorder %s27, 1
      %p170 = por %p168, %p169
      %p172 = scmp.ne.s32.totalorder %s157, %s171
      %p173 = scmp.eq.s32.totalorder %s27, 0
      %p174 = por %p172, %p173
      %s176 = sadd.s32 %s175, 1
      %p179 = scmp.eq.s32.totalorder %s21, 1
      %p180 = scmp.ne.s32.totalorder %s175, %s177
      %p181 = scmp.eq.s32.totalorder %s21, 0
      %p182 = por %p180, %p181
      %p183 = scmp.ne.s32.totalorder %s175, %s177
      %p184 = scmp.eq.s32.totalorder %s26, 1
      %p185 = por %p183, %p184
      %p186 = scmp.ne.s32.totalorder %s177, %s178
      %p187 = scmp.eq.s32.totalorder %s26, 0
      %p188 = por %p186, %p187
      %p189 = scmp.ne.s32.totalorder %s177, %s178
      %p190 = scmp.eq.s32.totalorder %s27, 1
      %p191 = por %p189, %p190
      %p193 = scmp.ne.s32.totalorder %s178, %s192
      %p194 = scmp.eq.s32.totalorder %s27, 0
      %p195 = por %p193, %p194
      %s197 = sadd.s32 %s196, 1
      %p200 = scmp.eq.s32.totalorder %s21, 1
      %p201 = scmp.ne.s32.totalorder %s196, %s198
      %p202 = scmp.eq.s32.totalorder %s21, 0
      %p203 = por %p201, %p202
      %p204 = scmp.ne.s32.totalorder %s196, %s198
      %p205 = scmp.eq.s32.totalorder %s26, 1
      %p206 = por %p204, %p205
      %p207 = scmp.ne.s32.totalorder %s198, %s199
      %p208 = scmp.eq.s32.totalorder %s26, 0
      %p209 = por %p207, %p208
      %p210 = scmp.ne.s32.totalorder %s198, %s199
      %p211 = scmp.eq.s32.totalorder %s27, 1
      %p212 = por %p210, %p211
      %p214 = scmp.ne.s32.totalorder %s199, %s213
      %p215 = scmp.eq.s32.totalorder %s27, 0
      %p216 = por %p214, %p215
      %s218 = sadd.s32 %s217, 1
      %p221 = scmp.eq.s32.totalorder %s21, 1
      %p222 = scmp.ne.s32.totalorder %s217, %s219
      %p223 = scmp.eq.s32.totalorder %s21, 0
      %p224 = por %p222, %p223
      %p225 = scmp.ne.s32.totalorder %s217, %s219
      %p226 = scmp.eq.s32.totalorder %s26, 1
      %p227 = por %p225, %p226
      %p228 = scmp.ne.s32.totalorder %s219, %s220
      %p229 = scmp.eq.s32.totalorder %s26, 0
      %p230 = por %p228, %p229
      %p231 = scmp.ne.s32.totalorder %s219, %s220
      %p232 = scmp.eq.s32.totalorder %s27, 1
      %p233 = por %p231, %p232
      %p235 = scmp.ne.s32.totalorder %s220, %s234
      %p236 = scmp.eq.s32.totalorder %s27, 0
      %p237 = por %p235, %p236
      %s239 = sadd.s32 %s238, 1
      %p242 = scmp.eq.s32.totalorder %s21, 1
      %p243 = scmp.ne.s32.totalorder %s238, %s240
      %p244 = scmp.eq.s32.totalorder %s21, 0
      %p245 = por %p243, %p244
      %p246 = scmp.ne.s32.totalorder %s238, %s240
      %p247 = scmp.eq.s32.totalorder %s26, 1
      %p248 = por %p246, %p247
      %p249 = scmp.ne.s32.totalorder %s240, %s241
      %p250 = scmp.eq.s32.totalorder %s26, 0
      %p251 = por %p249, %p250
      %p252 = scmp.ne.s32.totalorder %s240, %s241
      %p253 = scmp.eq.s32.totalorder %s27, 1
      %p254 = por %p252, %p253
      %p256 = scmp.ne.s32.totalorder %s241, %s255
      %p257 = scmp.eq.s32.totalorder %s27, 0
      %p258 = por %p256, %p257
      %s259 = ssub.s32 %s21, %s28
      %p260 = scmp.eq.s32.totalorder %s259, 0
      %s262 = sadd.s32 %s261, 1
      %s263 = scalar_select %p260, %s261, %s262
      %p266 = pneg %p260
      %p267 = scmp.eq.s32.totalorder %s21, 1
      %p268 = por %p266, %p267
      %p269 = scmp.ne.s32.totalorder %s261, %s264
      %p270 = scmp.eq.s32.totalorder %s21, 0
      %p271 = por %p269, %p270
      %p272 = scmp.ne.s32.totalorder %s261, %s264
      %p273 = scmp.eq.s32.totalorder %s26, 1
      %p274 = por %p272, %p273
      %p275 = scmp.ne.s32.totalorder %s264, %s265
      %p276 = scmp.eq.s32.totalorder %s26, 0
      %p277 = por %p275, %p276
      %p278 = scmp.ne.s32.totalorder %s264, %s265
      %p279 = scmp.eq.s32.totalorder %s27, 1
      %p280 = por %p278, %p279
      %p282 = scmp.ne.s32.totalorder %s265, %s281
      %p283 = scmp.eq.s32.totalorder %s27, 0
      %p284 = por %p282, %p283
      %s285 = ssub.s32 %s21, %s28
      %p286 = scmp.eq.s32.totalorder %s285, 0
      %s288 = sadd.s32 %s287, 1
      %s289 = scalar_select %p286, %s287, %s288
      %p292 = pneg %p286
      %p293 = scmp.eq.s32.totalorder %s21, 1
      %p294 = por %p292, %p293
      %p295 = scmp.ne.s32.totalorder %s287, %s290
      %p296 = scmp.eq.s32.totalorder %s21, 0
      %p297 = por %p295, %p296
      %p298 = scmp.ne.s32.totalorder %s287, %s290
      %p299 = scmp.eq.s32.totalorder %s26, 1
      %p300 = por %p298, %p299
      %p301 = scmp.ne.s32.totalorder %s290, %s291
      %p302 = scmp.eq.s32.totalorder %s26, 0
      %p303 = por %p301, %p302
      %p304 = scmp.ne.s32.totalorder %s290, %s291
      %p305 = scmp.eq.s32.totalorder %s27, 1
      %p306 = por %p304, %p305
      %p308 = scmp.ne.s32.totalorder %s291, %s307
      %p309 = scmp.eq.s32.totalorder %s27, 0
      %p310 = por %p308, %p309
      %p311 = scmp.le.s32.totalorder 1, %s21
      %p312 = scmp.lt.s32.totalorder %s21, 3
      %p313 = pnand %p311, %p312
      %p314 = pneg %p313
      // Predicated region
      $region9: #{tpu_custom_call.1} parent=5 // pred_check
        _
      $region10: #{tpu_custom_call.1} parent=5 // pred_check_branch
        %316 = sbr.rel (%p313) target = $region12
      $region11: #{tpu_custom_call.1} parent=5 // pred_region
        %s317 = ssub.s32 %s21, 1
        // Predicated region
        $region13: #{tpu_custom_call.1} parent=11 // pred_check
          %p318 = pneg %p68
        $region14: #{tpu_custom_call.1} parent=11 // pred_check_branch
          %320 = sbr.rel (%p318) target = $region16
        $region15: #{tpu_custom_call.1} parent=11 // pred_region
          _
        $region16: #{tpu_custom_call.1} parent=11 // pred_fallthru
          _
        // Predicated region
        $region17: #{tpu_custom_call.1} parent=11 // pred_check
          %p321 = pneg %p167
        $region18: #{tpu_custom_call.1} parent=11 // pred_check_branch
          %323 = sbr.rel (%p321) target = $region20
        $region19: #{tpu_custom_call.1} parent=11 // pred_region
          _
        $region20: #{tpu_custom_call.1} parent=11 // pred_fallthru
          _
        // Predicated region
        $region21: #{tpu_custom_call.1} parent=11 // pred_check
          %p324 = pneg %p188
        $region22: #{tpu_custom_call.1} parent=11 // pred_check_branch
          %326 = sbr.rel (%p324) target = $region24
        $region23: #{tpu_custom_call.1} parent=11 // pred_region
          _
        $region24: #{tpu_custom_call.1} parent=11 // pred_fallthru
          _
        // Predicated region
        $region25: #{tpu_custom_call.1} parent=11 // pred_check
          %p327 = pneg %p209
        $region26: #{tpu_custom_call.1} parent=11 // pred_check_branch
          %329 = sbr.rel (%p327) target = $region28
        $region27: #{tpu_custom_call.1} parent=11 // pred_region
          _
        $region28: #{tpu_custom_call.1} parent=11 // pred_fallthru
          _
        // Predicated region
        $region29: #{tpu_custom_call.1} parent=11 // pred_check
          %p330 = pneg %p230
        $region30: #{tpu_custom_call.1} parent=11 // pred_check_branch
          %332 = sbr.rel (%p330) target = $region32
        $region31: #{tpu_custom_call.1} parent=11 // pred_region
          _
        $region32: #{tpu_custom_call.1} parent=11 // pred_fallthru
          _
        // Predicated region
        $region33: #{tpu_custom_call.1} parent=11 // pred_check
          %p333 = pneg %p251
        $region34: #{tpu_custom_call.1} parent=11 // pred_check_branch
          %335 = sbr.rel (%p333) target = $region36
        $region35: #{tpu_custom_call.1} parent=11 // pred_region
          _
        $region36: #{tpu_custom_call.1} parent=11 // pred_fallthru
          _
      $region12: #{tpu_custom_call.1} parent=5 // pred_fallthru
        _
      %p336 = scmp.lt.s32.totalorder %s21, 2
      // Predicated region
      $region37: #{tpu_custom_call.1} parent=5 // pred_check
        %p337 = pneg %p336
      $region38: #{tpu_custom_call.1} parent=5 // pred_check_branch
        %339 = sbr.rel (%p337) target = $region40
      $region39: #{tpu_custom_call.1} parent=5 // pred_region
        // Predicated region
        $region41: #{tpu_custom_call.1} parent=39 // pred_check
          %p340 = pneg %p41
        $region42: #{tpu_custom_call.1} parent=39 // pred_check_branch
          %342 = sbr.rel (%p340) target = $region44
        $region43: #{tpu_custom_call.1} parent=39 // pred_region
          %s343 = sand.u32 %s31, 1
          %s344 = scalar_lea.sflag [#allocation3], %s343
          %s345 = sand.u32 %s31, 1
          %s346 = smul.addr %s345, 4
          %s347 = scalar_lea.vmem [#allocation2], %s346
          %s349 = ssub.s32 64, 64
          %350 = vsyncadd %s344, %s349
          %s351 = smul.addr %s21, 2
          %s352 = smul.addr %s351, 32
          %s353 = scalar_lea.hbm %s0, %s352
          %s355 = sshll.u32 %s347, 4
          %s356 = int_to_ptr.vmem [resolvable:$true] %s355
          %358 = dma.hbm_to_vmem [thread:$0]  %s353, 64, %s356, %s344
        $region44: #{tpu_custom_call.1} parent=39 // pred_fallthru
          _
        // Predicated region
        $region45: #{tpu_custom_call.1} parent=39 // pred_check
          %p359 = pneg %p88
        $region46: #{tpu_custom_call.1} parent=39 // pred_check_branch
          %361 = sbr.rel (%p359) target = $region48
        $region47: #{tpu_custom_call.1} parent=39 // pred_region
          %p362 = scmp.lt.s32.totalorder %s21, 1
          %s363 = scalar_select %p362, %s21, 1
          %s364 = smul.addr %s363, 2
          %s365 = smul.addr %s364, 4
          %s366 = scalar_lea.vmem %s2, %s365
        $region48: #{tpu_custom_call.1} parent=39 // pred_fallthru
          _
        // Predicated region
        $region49: #{tpu_custom_call.1} parent=39 // pred_check
          %p367 = pneg %p114
        $region50: #{tpu_custom_call.1} parent=39 // pred_check_branch
          %369 = sbr.rel (%p367) target = $region52
        $region51: #{tpu_custom_call.1} parent=39 // pred_region
          %p370 = scmp.lt.s32.totalorder %s21, 1
          %s371 = scalar_select %p370, %s21, 1
          %s372 = smul.addr %s371, 4
          %s373 = scalar_lea.vmem %s3, %s372
        $region52: #{tpu_custom_call.1} parent=39 // pred_fallthru
          _
        // Predicated region
        $region53: #{tpu_custom_call.1} parent=39 // pred_check
          %p374 = pneg %p140
        $region54: #{tpu_custom_call.1} parent=39 // pred_check_branch
          %376 = sbr.rel (%p374) target = $region56
        $region55: #{tpu_custom_call.1} parent=39 // pred_region
          %p377 = scmp.lt.s32.totalorder %s21, 1
          %s378 = scalar_select %p377, %s21, 1
          %s379 = smul.addr %s378, 4
          %s380 = scalar_lea.vmem %s4, %s379
        $region56: #{tpu_custom_call.1} parent=39 // pred_fallthru
          _
      $region40: #{tpu_custom_call.1} parent=5 // pred_fallthru
        _
      %p381 = scmp.le.s32.totalorder 1, %s21
      %p382 = scmp.lt.s32.totalorder %s21, 3
      %p383 = pnand %p381, %p382
      %p384 = pneg %p383
      // Predicated region
      $region57: #{tpu_custom_call.1} parent=5 // pred_check
        _
      $region58: #{tpu_custom_call.1} parent=5 // pred_check_branch
        %386 = sbr.rel (%p383) target = $region60
      $region59: #{tpu_custom_call.1} parent=5 // pred_region
        %s387 = ssub.s32 %s21, 1
        %s388 = sand.u32 %s34, 1
        %s389 = scalar_lea.sflag [#allocation3], %s388
        %s390 = sand.u32 %s34, 1
        %s391 = smul.addr %s390, 4
        %s392 = scalar_lea.vmem [#allocation2], %s391
        // Predicated region
        $region61: #{tpu_custom_call.1} parent=59 // pred_check
          %p393 = pneg %p47
        $region62: #{tpu_custom_call.1} parent=59 // pred_check_branch
          %395 = sbr.rel (%p393) target = $region64
        $region63: #{tpu_custom_call.1} parent=59 // pred_region
          %396 = dma.done %s389, 64
        $region64: #{tpu_custom_call.1} parent=59 // pred_fallthru
          _
        %s397 = sand.u32 %s34, 1
        %s398 = scalar_lea.sflag [#allocation3], %s397
        %s399 = sand.u32 %s34, 1
        %s400 = smul.addr %s399, 4
        %s401 = scalar_lea.vmem [#allocation2], %s400
        %p402 = pneg %p47
        %p403 = pneg %p44
        %p404 = pneg %p68
        %p405 = pneg %p65
        %p406 = scmp.lt.s32.totalorder %s26, 1
        %s407 = scalar_select %p406, %s26, 1
        %s408 = smul.addr %s407, 2
        %s409 = smul.addr %s408, 4
        %s410 = scalar_lea.vmem %s2, %s409
        %p411 = pneg %p94
        %p412 = pneg %p91
        %p413 = scmp.lt.s32.totalorder %s26, 1
        %s414 = scalar_select %p413, %s26, 1
        %s415 = smul.addr %s414, 4
        %s416 = scalar_lea.vmem %s3, %s415
        %p417 = pneg %p120
        %p418 = pneg %p117
        %p419 = scmp.lt.s32.totalorder %s26, 1
        %s420 = scalar_select %p419, %s26, 1
        %s421 = smul.addr %s420, 4
        %s422 = scalar_lea.vmem %s4, %s421
        %p423 = pneg %p146
        %p424 = pneg %p143
        %p425 = pneg %p167
        %p426 = pneg %p164
        %p427 = pneg %p188
        %p428 = pneg %p185
        %p429 = pneg %p209
        %p430 = pneg %p206
        %p431 = pneg %p230
        %p432 = pneg %p227
        %p433 = pneg %p251
        %p434 = pneg %p248
        %p435 = pneg %p277
        %p436 = pneg %p274
        %p437 = scmp.lt.s32.totalorder %s26, 1
        %s438 = scalar_select %p437, %s26, 1
        %s439 = smul.addr %s438, 4
        %s440 = smul.addr %s439, 8
        %s441 = scalar_lea.vmem %s10, %s440
        %p442 = pneg %p303
        %p443 = pneg %p300
        %p444 = scmp.lt.s32.totalorder %s26, 1
        %s445 = scalar_select %p444, %s26, 1
        %s446 = smul.addr %s445, 2
        %s447 = smul.addr %s446, 4
        %s448 = scalar_lea.vmem %s11, %s447
        %p449 = scmp.lt.s32.totalorder %s26, 1
        %s450 = scalar_select %p449, %s26, 1
        %s451 = smul.addr %s450, 2
        %s452 = smul.addr %s451, 4
        %s453 = scalar_lea.vmem %s2, %s452
        %p454 = scmp.lt.s32.totalorder %s26, 1
        %s455 = scalar_select %p454, %s26, 1
        %s456 = smul.addr %s455, 4
        %s457 = scalar_lea.vmem %s3, %s456
        %p458 = scmp.lt.s32.totalorder %s26, 1
        %s459 = scalar_select %p458, %s26, 1
        %s460 = smul.addr %s459, 4
        %s461 = scalar_lea.vmem %s4, %s460
        %p462 = scmp.lt.s32.totalorder %s26, 1
        %s463 = scalar_select %p462, %s26, 1
        %s464 = smul.addr %s463, 4
        %s465 = smul.addr %s464, 8
        %s466 = scalar_lea.vmem %s10, %s465
        %p467 = scmp.lt.s32.totalorder %s26, 1
        %s468 = scalar_select %p467, %s26, 1
        %s469 = smul.addr %s468, 2
        %s470 = smul.addr %s469, 4
        %s471 = scalar_lea.vmem %s11, %s470
        %v473 = vld [vmem:[%s392] sm:$0xf]
        %v474 = vmul.f32 %v473, 15.0
        %v475 = vfloor.f32 %v474
        %v476 = vmax.f32 %v475, 0.0
        %v477 = vmin.f32 %v476, 15.0
        %v478 = vadd.f32 %v477, 1.0
        %v479 = vmax.f32 %v478, 0.0
        %v480 = vmin.f32 %v479, 15.0
        %v481 = vsub.f32 %v474, %v477
        %v482 = vmax.f32 %v481, 0.0
        %v483 = vmin.f32 %v482, 1.0
        %v484 = vlaneseq
        %v485 = vshrl.u32 %v484, 7
        %v486 = vadd.s32 %v485, 8
        %v487 = vcvt.f32.s32.to.zero.pseudo %v477
        %v488 = vlaneseq
        %v489 = vshrl.u32 %v488, 7
        %v490 = vsub.s32 0, %v489
        %v491 = vrot.slane %v487, %v490
        %v492 = vlaneseq
        %v493 = vshrl.u32 %v492, 7
        %v494 = vsub.s32 2, %v493
        %v495 = vrot.slane %v487, %v494
        %v496 = vlaneseq
        %v497 = vshrl.u32 %v496, 7
        %v498 = vsub.s32 0, %v497
        %v499 = vrot.slane %v491, %v498
        %v500 = vlaneseq
        %v501 = vshrl.u32 %v500, 7
        %v502 = vsub.s32 0, %v501
        %v503 = vrot.slane %v495, %v502
        %vm504 = vcmp.eq.s32.totalorder %v485, %v499
        %vm505 = vcmp.eq.s32.totalorder %v485, %v503
        %vm506 = vcmp.eq.s32.totalorder %v486, %v499
        %vm507 = vcmp.eq.s32.totalorder %v486, %v503
        %v508 = vsub.f32 1.0, %v483
        %v510 = vlaneseq
        %v511 = vshrl.u32 %v510, 7
        %v512 = vsub.s32 0, %v511
        %v513 = vrot.slane %v508, %v512
        %v514 = vlaneseq
        %v515 = vshrl.u32 %v514, 7
        %v516 = vsub.s32 2, %v515
        %v517 = vrot.slane %v508, %v516
        %v520 = vlaneseq
        %v521 = vshrl.u32 %v520, 7
        %v522 = vsub.s32 0, %v521
        %v523 = vrot.slane %v513, %v522
        %v524 = vlaneseq
        %v525 = vshrl.u32 %v524, 7
        %v526 = vsub.s32 0, %v525
        %v527 = vrot.slane %v517, %v526
        %v528 = vsel %vm504, %v523, 0.0
        %v529 = vsel %vm505, %v527, 0.0
        %v530 = vsel %vm506, %v523, 0.0
        %v531 = vsel %vm507, %v527, 0.0
        %v532 = vcvt.f32.s32.to.zero.pseudo %v480
        %v533 = vlaneseq
        %v534 = vshrl.u32 %v533, 7
        %v535 = vsub.s32 0, %v534
        %v536 = vrot.slane %v532, %v535
        %v537 = vlaneseq
        %v538 = vshrl.u32 %v537, 7
        %v539 = vsub.s32 2, %v538
        %v540 = vrot.slane %v532, %v539
        %v541 = vlaneseq
        %v542 = vshrl.u32 %v541, 7
        %v543 = vsub.s32 0, %v542
        %v544 = vrot.slane %v536, %v543
        %v545 = vlaneseq
        %v546 = vshrl.u32 %v545, 7
        %v547 = vsub.s32 0, %v546
        %v548 = vrot.slane %v540, %v547
        %vm549 = vcmp.eq.s32.totalorder %v485, %v544
        %vm550 = vcmp.eq.s32.totalorder %v485, %v548
        %vm551 = vcmp.eq.s32.totalorder %v486, %v544
        %vm552 = vcmp.eq.s32.totalorder %v486, %v548
        %v554 = vlaneseq
        %v555 = vshrl.u32 %v554, 7
        %v556 = vsub.s32 0, %v555
        %v557 = vrot.slane %v483, %v556
        %v558 = vlaneseq
        %v559 = vshrl.u32 %v558, 7
        %v560 = vsub.s32 2, %v559
        %v561 = vrot.slane %v483, %v560
        %v564 = vlaneseq
        %v565 = vshrl.u32 %v564, 7
        %v566 = vsub.s32 0, %v565
        %v567 = vrot.slane %v557, %v566
        %v568 = vlaneseq
        %v569 = vshrl.u32 %v568, 7
        %v570 = vsub.s32 0, %v569
        %v571 = vrot.slane %v561, %v570
        %v572 = vsel %vm549, %v567, 0.0
        %v573 = vsel %vm550, %v571, 0.0
        %v574 = vsel %vm551, %v567, 0.0
        %v575 = vsel %vm552, %v571, 0.0
        %v576 = vadd.f32 %v528, %v572
        %v577 = vadd.f32 %v529, %v573
        %v578 = vadd.f32 %v530, %v574
        %v579 = vadd.f32 %v531, %v575
        %v580 = vlaneseq
        %v581 = vshrl.u32 %v580, 7
        %v582 = vsub.s32 1, %v581
        %v583 = vrot.slane %v487, %v582
        %v584 = vlaneseq
        %v585 = vshrl.u32 %v584, 7
        %v586 = vsub.s32 3, %v585
        %v587 = vrot.slane %v487, %v586
        %v588 = vlaneseq
        %v589 = vshrl.u32 %v588, 7
        %v590 = vsub.s32 1, %v589
        %v591 = vrot.slane %v583, %v590
        %v592 = vlaneseq
        %v593 = vshrl.u32 %v592, 7
        %v594 = vsub.s32 1, %v593
        %v595 = vrot.slane %v587, %v594
        %vm596 = vcmp.eq.s32.totalorder %v485, %v591
        %vm597 = vcmp.eq.s32.totalorder %v485, %v595
        %vm598 = vcmp.eq.s32.totalorder %v486, %v591
        %vm599 = vcmp.eq.s32.totalorder %v486, %v595
        %v600 = vlaneseq
        %v601 = vshrl.u32 %v600, 7
        %v602 = vsub.s32 1, %v601
        %v603 = vrot.slane %v508, %v602
        %v604 = vlaneseq
        %v605 = vshrl.u32 %v604, 7
        %v606 = vsub.s32 3, %v605
        %v607 = vrot.slane %v508, %v606
        %v610 = vlaneseq
        %v611 = vshrl.u32 %v610, 7
        %v612 = vsub.s32 1, %v611
        %v613 = vrot.slane %v603, %v612
        %v614 = vlaneseq
        %v615 = vshrl.u32 %v614, 7
        %v616 = vsub.s32 1, %v615
        %v617 = vrot.slane %v607, %v616
        %v618 = vsel %vm596, %v613, 0.0
        %v619 = vsel %vm597, %v617, 0.0
        %v620 = vsel %vm598, %v613, 0.0
        %v621 = vsel %vm599, %v617, 0.0
        %v622 = vlaneseq
        %v623 = vshrl.u32 %v622, 7
        %v624 = vsub.s32 1, %v623
        %v625 = vrot.slane %v532, %v624
        %v626 = vlaneseq
        %v627 = vshrl.u32 %v626, 7
        %v628 = vsub.s32 3, %v627
        %v629 = vrot.slane %v532, %v628
        %v630 = vlaneseq
        %v631 = vshrl.u32 %v630, 7
        %v632 = vsub.s32 1, %v631
        %v633 = vrot.slane %v625, %v632
        %v634 = vlaneseq
        %v635 = vshrl.u32 %v634, 7
        %v636 = vsub.s32 1, %v635
        %v637 = vrot.slane %v629, %v636
        %vm638 = vcmp.eq.s32.totalorder %v485, %v633
        %vm639 = vcmp.eq.s32.totalorder %v485, %v637
        %vm640 = vcmp.eq.s32.totalorder %v486, %v633
        %vm641 = vcmp.eq.s32.totalorder %v486, %v637
        %v642 = vlaneseq
        %v643 = vshrl.u32 %v642, 7
        %v644 = vsub.s32 1, %v643
        %v645 = vrot.slane %v483, %v644
        %v646 = vlaneseq
        %v647 = vshrl.u32 %v646, 7
        %v648 = vsub.s32 3, %v647
        %v649 = vrot.slane %v483, %v648
        %v652 = vlaneseq
        %v653 = vshrl.u32 %v652, 7
        %v654 = vsub.s32 1, %v653
        %v655 = vrot.slane %v645, %v654
        %v656 = vlaneseq
        %v657 = vshrl.u32 %v656, 7
        %v658 = vsub.s32 1, %v657
        %v659 = vrot.slane %v649, %v658
        %v660 = vsel %vm638, %v655, 0.0
        %v661 = vsel %vm639, %v659, 0.0
        %v662 = vsel %vm640, %v655, 0.0
        %v663 = vsel %vm641, %v659, 0.0
        %v664 = vadd.f32 %v618, %v660
        %v665 = vadd.f32 %v619, %v661
        %v666 = vadd.f32 %v620, %v662
        %v667 = vadd.f32 %v621, %v663
        %v672 = vcombine.low %v664, %v665
        %v673 = vcombine.high %v664, %v665
        %v675 = vunpack.c.l.s4 1966171168
        %v676 = vunpack.c.0.s8 %v675
        %v677 = vlaneseq
        %v678 = vshrl.u32 %v677, 7
        %v679 = vsub.s32 %v676, %v678
        %v680 = vrot.slane %v672, %v679
        %v682 = vunpack.c.l.s4 1966171168
        %v683 = vunpack.c.0.s8 %v682
        %v684 = vlaneseq
        %v685 = vshrl.u32 %v684, 7
        %v686 = vsub.s32 %v683, %v685
        %v687 = vrot.slane %v673, %v686
        %v688 = vcombine.high %v680, %v680
        %v689 = vcombine.high %v687, %v687
        %v691 = vunpack.c.l.s4 1966171168
        %v692 = vunpack.c.0.s8 %v691
        %v693 = vlaneseq
        %v694 = vshrl.u32 %v693, 7
        %v695 = vsub.s32 %v692, %v694
        %v696 = vrot.slane %v680, %v695
        %v698 = vunpack.c.l.s4 1966171168
        %v699 = vunpack.c.0.s8 %v698
        %v700 = vlaneseq
        %v701 = vshrl.u32 %v700, 7
        %v702 = vsub.s32 %v699, %v701
        %v703 = vrot.slane %v687, %v702
        %v705 = vunpack.c.l.s4 1966171168
        %v706 = vunpack.c.0.s8 %v705
        %v707 = vlaneseq
        %v708 = vshrl.u32 %v707, 7
        %v709 = vsub.s32 %v706, %v708
        %v710 = vrot.slane %v688, %v709
        %v712 = vunpack.c.l.s4 1966171168
        %v713 = vunpack.c.0.s8 %v712
        %v714 = vlaneseq
        %v715 = vshrl.u32 %v714, 7
        %v716 = vsub.s32 %v713, %v715
        %v717 = vrot.slane %v689, %v716
        %v718 = vcombine.high %v696, %v696
        %v719 = vcombine.high %v703, %v703
        %v720 = vcombine.high %v710, %v710
        %v721 = vcombine.high %v717, %v717
        %v722 = vcombine.low %v666, %v667
        %v723 = vcombine.high %v666, %v667
        %v725 = vunpack.c.l.s4 1966171168
        %v726 = vunpack.c.0.s8 %v725
        %v727 = vlaneseq
        %v728 = vshrl.u32 %v727, 7
        %v729 = vsub.s32 %v726, %v728
        %v730 = vrot.slane %v722, %v729
        %v732 = vunpack.c.l.s4 1966171168
        %v733 = vunpack.c.0.s8 %v732
        %v734 = vlaneseq
        %v735 = vshrl.u32 %v734, 7
        %v736 = vsub.s32 %v733, %v735
        %v737 = vrot.slane %v723, %v736
        %v738 = vcombine.high %v730, %v730
        %v739 = vcombine.high %v737, %v737
        %v741 = vunpack.c.l.s4 1966171168
        %v742 = vunpack.c.0.s8 %v741
        %v743 = vlaneseq
        %v744 = vshrl.u32 %v743, 7
        %v745 = vsub.s32 %v742, %v744
        %v746 = vrot.slane %v730, %v745
        %v748 = vunpack.c.l.s4 1966171168
        %v749 = vunpack.c.0.s8 %v748
        %v750 = vlaneseq
        %v751 = vshrl.u32 %v750, 7
        %v752 = vsub.s32 %v749, %v751
        %v753 = vrot.slane %v737, %v752
        %v755 = vunpack.c.l.s4 1966171168
        %v756 = vunpack.c.0.s8 %v755
        %v757 = vlaneseq
        %v758 = vshrl.u32 %v757, 7
        %v759 = vsub.s32 %v756, %v758
        %v760 = vrot.slane %v738, %v759
        %v762 = vunpack.c.l.s4 1966171168
        %v763 = vunpack.c.0.s8 %v762
        %v764 = vlaneseq
        %v765 = vshrl.u32 %v764, 7
        %v766 = vsub.s32 %v763, %v765
        %v767 = vrot.slane %v739, %v766
        %v768 = vcombine.high %v746, %v746
        %v769 = vcombine.high %v753, %v753
        %v770 = vcombine.high %v760, %v760
        %v771 = vcombine.high %v767, %v767
        %v772 = vlaneseq
        %v773 = vshrl.u32 %v772, 7
        %v774 = vsub.s32 0, %v773
        %v775 = vrot.slane %v696, %v774
        %v776 = vlaneseq
        %v777 = vshrl.u32 %v776, 7
        %v778 = vsub.s32 1, %v777
        %v779 = vrot.slane %v696, %v778
        %v780 = vlaneseq
        %v781 = vshrl.u32 %v780, 7
        %v782 = vsub.s32 0, %v781
        %v783 = vrot.slane %v710, %v782
        %v784 = vlaneseq
        %v785 = vshrl.u32 %v784, 7
        %v786 = vsub.s32 1, %v785
        %v787 = vrot.slane %v710, %v786
        %v788 = vlaneseq
        %v789 = vshrl.u32 %v788, 7
        %v790 = vsub.s32 0, %v789
        %v791 = vrot.slane %v718, %v790
        %v792 = vlaneseq
        %v793 = vshrl.u32 %v792, 7
        %v794 = vsub.s32 1, %v793
        %v795 = vrot.slane %v718, %v794
        %v796 = vlaneseq
        %v797 = vshrl.u32 %v796, 7
        %v798 = vsub.s32 0, %v797
        %v799 = vrot.slane %v720, %v798
        %v800 = vlaneseq
        %v801 = vshrl.u32 %v800, 7
        %v802 = vsub.s32 1, %v801
        %v803 = vrot.slane %v720, %v802
        %v804 = vlaneseq
        %v805 = vshrl.u32 %v804, 7
        %v806 = vsub.s32 0, %v805
        %v807 = vrot.slane %v703, %v806
        %v808 = vlaneseq
        %v809 = vshrl.u32 %v808, 7
        %v810 = vsub.s32 1, %v809
        %v811 = vrot.slane %v703, %v810
        %v812 = vlaneseq
        %v813 = vshrl.u32 %v812, 7
        %v814 = vsub.s32 0, %v813
        %v815 = vrot.slane %v717, %v814
        %v816 = vlaneseq
        %v817 = vshrl.u32 %v816, 7
        %v818 = vsub.s32 1, %v817
        %v819 = vrot.slane %v717, %v818
        %v820 = vlaneseq
        %v821 = vshrl.u32 %v820, 7
        %v822 = vsub.s32 0, %v821
        %v823 = vrot.slane %v719, %v822
        %v824 = vlaneseq
        %v825 = vshrl.u32 %v824, 7
        %v826 = vsub.s32 1, %v825
        %v827 = vrot.slane %v719, %v826
        %v828 = vlaneseq
        %v829 = vshrl.u32 %v828, 7
        %v830 = vsub.s32 0, %v829
        %v831 = vrot.slane %v721, %v830
        %v832 = vlaneseq
        %v833 = vshrl.u32 %v832, 7
        %v834 = vsub.s32 1, %v833
        %v835 = vrot.slane %v721, %v834
        %v836 = vlaneseq
        %v837 = vshrl.u32 %v836, 7
        %v838 = vsub.s32 0, %v837
        %v839 = vrot.slane %v746, %v838
        %v840 = vlaneseq
        %v841 = vshrl.u32 %v840, 7
        %v842 = vsub.s32 1, %v841
        %v843 = vrot.slane %v746, %v842
        %v844 = vlaneseq
        %v845 = vshrl.u32 %v844, 7
        %v846 = vsub.s32 0, %v845
        %v847 = vrot.slane %v760, %v846
        %v848 = vlaneseq
        %v849 = vshrl.u32 %v848, 7
        %v850 = vsub.s32 1, %v849
        %v851 = vrot.slane %v760, %v850
        %v852 = vlaneseq
        %v853 = vshrl.u32 %v852, 7
        %v854 = vsub.s32 0, %v853
        %v855 = vrot.slane %v768, %v854
        %v856 = vlaneseq
        %v857 = vshrl.u32 %v856, 7
        %v858 = vsub.s32 1, %v857
        %v859 = vrot.slane %v768, %v858
        %v860 = vlaneseq
        %v861 = vshrl.u32 %v860, 7
        %v862 = vsub.s32 0, %v861
        %v863 = vrot.slane %v770, %v862
        %v864 = vlaneseq
        %v865 = vshrl.u32 %v864, 7
        %v866 = vsub.s32 1, %v865
        %v867 = vrot.slane %v770, %v866
        %v868 = vlaneseq
        %v869 = vshrl.u32 %v868, 7
        %v870 = vsub.s32 0, %v869
        %v871 = vrot.slane %v753, %v870
        %v872 = vlaneseq
        %v873 = vshrl.u32 %v872, 7
        %v874 = vsub.s32 1, %v873
        %v875 = vrot.slane %v753, %v874
        %v876 = vlaneseq
        %v877 = vshrl.u32 %v876, 7
        %v878 = vsub.s32 0, %v877
        %v879 = vrot.slane %v767, %v878
        %v880 = vlaneseq
        %v881 = vshrl.u32 %v880, 7
        %v882 = vsub.s32 1, %v881
        %v883 = vrot.slane %v767, %v882
        %v884 = vlaneseq
        %v885 = vshrl.u32 %v884, 7
        %v886 = vsub.s32 0, %v885
        %v887 = vrot.slane %v769, %v886
        %v888 = vlaneseq
        %v889 = vshrl.u32 %v888, 7
        %v890 = vsub.s32 1, %v889
        %v891 = vrot.slane %v769, %v890
        %v892 = vlaneseq
        %v893 = vshrl.u32 %v892, 7
        %v894 = vsub.s32 0, %v893
        %v895 = vrot.slane %v771, %v894
        %v896 = vlaneseq
        %v897 = vshrl.u32 %v896, 7
        %v898 = vsub.s32 1, %v897
        %v899 = vrot.slane %v771, %v898
        %v932 = vmul.f32 %v775, %v576
        %v933 = vmul.f32 %v779, %v577
        %v934 = vmul.f32 %v775, %v578
        %v935 = vmul.f32 %v779, %v579
        %v936 = vmul.f32 %v783, %v576
        %v937 = vmul.f32 %v787, %v577
        %v938 = vmul.f32 %v783, %v578
        %v939 = vmul.f32 %v787, %v579
        %v940 = vmul.f32 %v791, %v576
        %v941 = vmul.f32 %v795, %v577
        %v942 = vmul.f32 %v791, %v578
        %v943 = vmul.f32 %v795, %v579
        %v944 = vmul.f32 %v799, %v576
        %v945 = vmul.f32 %v803, %v577
        %v946 = vmul.f32 %v799, %v578
        %v947 = vmul.f32 %v803, %v579
        %v948 = vmul.f32 %v807, %v576
        %v949 = vmul.f32 %v811, %v577
        %v950 = vmul.f32 %v807, %v578
        %v951 = vmul.f32 %v811, %v579
        %v952 = vmul.f32 %v815, %v576
        %v953 = vmul.f32 %v819, %v577
        %v954 = vmul.f32 %v815, %v578
        %v955 = vmul.f32 %v819, %v579
        %v956 = vmul.f32 %v823, %v576
        %v957 = vmul.f32 %v827, %v577
        %v958 = vmul.f32 %v823, %v578
        %v959 = vmul.f32 %v827, %v579
        %v960 = vmul.f32 %v831, %v576
        %v961 = vmul.f32 %v835, %v577
        %v962 = vmul.f32 %v831, %v578
        %v963 = vmul.f32 %v835, %v579
        %v964 = vmul.f32 %v839, %v576
        %v965 = vmul.f32 %v843, %v577
        %v966 = vmul.f32 %v839, %v578
        %v967 = vmul.f32 %v843, %v579
        %v968 = vmul.f32 %v847, %v576
        %v969 = vmul.f32 %v851, %v577
        %v970 = vmul.f32 %v847, %v578
        %v971 = vmul.f32 %v851, %v579
        %v972 = vmul.f32 %v855, %v576
        %v973 = vmul.f32 %v859, %v577
        %v974 = vmul.f32 %v855, %v578
        %v975 = vmul.f32 %v859, %v579
        %v976 = vmul.f32 %v863, %v576
        %v977 = vmul.f32 %v867, %v577
        %v978 = vmul.f32 %v863, %v578
        %v979 = vmul.f32 %v867, %v579
        %v980 = vmul.f32 %v871, %v576
        %v981 = vmul.f32 %v875, %v577
        %v982 = vmul.f32 %v871, %v578
        %v983 = vmul.f32 %v875, %v579
        %v984 = vmul.f32 %v879, %v576
        %v985 = vmul.f32 %v883, %v577
        %v986 = vmul.f32 %v879, %v578
        %v987 = vmul.f32 %v883, %v579
        %v988 = vmul.f32 %v887, %v576
        %v989 = vmul.f32 %v891, %v577
        %v990 = vmul.f32 %v887, %v578
        %v991 = vmul.f32 %v891, %v579
        %v992 = vmul.f32 %v895, %v576
        %v993 = vmul.f32 %v899, %v577
        %v994 = vmul.f32 %v895, %v578
        %v995 = vmul.f32 %v899, %v579
        %v996 = vld [vmem:[%s1] sm:$0xff]
        %v997 = vld [vmem:[%s1 + $0x8] sm:$0xff]
        %v998 = vld [vmem:[%s1 + $0x10] sm:$0xf]
        %v999 = vld [vmem:[%s1 + $0x18] sm:$0xf]
        %v1000 = vpack.c.bf16 %v998, %v996
        %v1001 = vpack.c.bf16 %v999, %v997
        %v1002 = vpack.c.bf16 %v934, %v932
        %v1003 = vpack.c.bf16 %v935, %v933
        %v1004 = vpack.c.bf16 %v938, %v936
        %v1005 = vpack.c.bf16 %v939, %v937
        %v1006 = vpack.c.bf16 %v942, %v940
        %v1007 = vpack.c.bf16 %v943, %v941
        %v1008 = vpack.c.bf16 %v946, %v944
        %v1009 = vpack.c.bf16 %v947, %v945
        %v1010 = vpack.c.bf16 %v950, %v948
        %v1011 = vpack.c.bf16 %v951, %v949
        %v1012 = vpack.c.bf16 %v954, %v952
        %v1013 = vpack.c.bf16 %v955, %v953
        %v1014 = vpack.c.bf16 %v958, %v956
        %v1015 = vpack.c.bf16 %v959, %v957
        %v1016 = vpack.c.bf16 %v962, %v960
        %v1017 = vpack.c.bf16 %v963, %v961
        %v1018 = vpack.c.bf16 %v966, %v964
        %v1019 = vpack.c.bf16 %v967, %v965
        %v1020 = vpack.c.bf16 %v970, %v968
        %v1021 = vpack.c.bf16 %v971, %v969
        %v1022 = vpack.c.bf16 %v974, %v972
        %v1023 = vpack.c.bf16 %v975, %v973
        %v1024 = vpack.c.bf16 %v978, %v976
        %v1025 = vpack.c.bf16 %v979, %v977
        %v1026 = vpack.c.bf16 %v982, %v980
        %v1027 = vpack.c.bf16 %v983, %v981
        %v1028 = vpack.c.bf16 %v986, %v984
        %v1029 = vpack.c.bf16 %v987, %v985
        %v1030 = vpack.c.bf16 %v990, %v988
        %v1031 = vpack.c.bf16 %v991, %v989
        %v1032 = vpack.c.bf16 %v994, %v992
        %v1033 = vpack.c.bf16 %v995, %v993
        %1034 = vmatprep.subr.bf16.mxu0 %v1003
        %1035 = vmatpush1.bf16.msra.mxu0 %v1002
        %1036 = vmatprep.subr.bf16.mxu0 %v1005
        %1037 = vmatpush1.bf16.msra.mxu0 %v1004
        %1038 = vmatprep.subr.bf16.mxu0 %v1007
        %1039 = vmatpush1.bf16.msra.mxu0 %v1006
        %1040 = vmatprep.subr.bf16.mxu0 %v1009
        %1041 = vmatpush1.bf16.msra.mxu0 %v1008
        %1042 = vmatprep.subr.bf16.mxu0 %v1011
        %1043 = vmatpush1.bf16.msra.mxu0 %v1010
        %1044 = vmatprep.subr.bf16.mxu0 %v1013
        %1045 = vmatpush1.bf16.msra.mxu0 %v1012
        %1046 = vmatprep.subr.bf16.mxu0 %v1015
        %1047 = vmatpush1.bf16.msra.mxu0 %v1014
        %1048 = vmatprep.subr.bf16.mxu0 %v1017
        %1049 = vmatpush1.bf16.msra.mxu0 %v1016
        %1050 = vmatprep.subr.bf16.mxu0 %v1019
        %1051 = vmatpush1.bf16.msra.mxu0 %v1018
        %1052 = vmatprep.subr.bf16.mxu0 %v1021
        %1053 = vmatpush1.bf16.msra.mxu0 %v1020
        %1054 = vmatprep.subr.bf16.mxu0 %v1023
        %1055 = vmatpush1.bf16.msra.mxu0 %v1022
        %1056 = vmatprep.subr.bf16.mxu0 %v1025
        %1057 = vmatpush1.bf16.msra.mxu0 %v1024
        %1058 = vmatprep.subr.bf16.mxu0 %v1027
        %1059 = vmatpush1.bf16.msra.mxu0 %v1026
        %1060 = vmatprep.subr.bf16.mxu0 %v1029
        %1061 = vmatpush1.bf16.msra.mxu0 %v1028
        %1062 = vmatprep.subr.bf16.mxu0 %v1031
        %1063 = vmatpush1.bf16.msra.mxu0 %v1030
        %1064 = vmatprep.subr.bf16.mxu0 %v1033
        %1065 = vmatpush1.bf16.msra.mxu0 %v1032
        %1066 = vmatprep.mubr.bf16.mxu0 %v1001
        %1067 = vmatmul.mubr.bf16.gmra.mrb[0].mxu0 %v1000
        %v1068 = vpop.f32.mrb[0].mxu0
        %v1069 = vadd.f32 0.0, %v1068
        %v1070 = vpop.f32.mrb[0].mxu0
        %v1071 = vadd.f32 0.0, %v1070
        %v1072 = vpop.f32.mrb[0].mxu0
        %v1073 = vadd.f32 0.0, %v1072
        %v1074 = vpop.f32.mrb[0].mxu0
        %v1075 = vadd.f32 0.0, %v1074
        %1076 = vdwg.mxu0
        %v1077 = vld [vmem:[%s453] sm:$0x77]
        %v1078 = vld [vmem:[%s457] sm:$0x7]
        %v1079 = vld [vmem:[%s461] sm:$0x7]
        %1080 = vst [vmem:[%s466] sm:$0x7] %v1069
        %1081 = vst [vmem:[%s466 + $0x8] sm:$0x7] %v1071
        %v1083 = vcombine.high %v1077, %v1077
        %v1084 = vrot.slane %v1077, 5
        %v1085 = vrot.slane %v1083, 5
        %v1088 = vmul.f32 %v1069, %v1084
        %v1089 = vmul.f32 %v1071, %v1085
        %1090 = vst [vmem:[%s466] sm:$0x38] %v1088
        %1091 = vst [vmem:[%s466 + $0x8] sm:$0x38] %v1089
        %1093 = vset.pattern.permute.xlu0 0
        %1094 = vperm.xlu0 %1093, %v1078
        %v1095 = vpop.permute.xlu0 %1094
        %v1096 = vrot.slane %v1095, 2
        %v1098 = vmul.f32 %v1069, %v1096
        %v1099 = vmul.f32 %v1071, %v1096
        %v1100 = vmul.f32 %v1073, %v1096
        %v1101 = vmul.f32 %v1075, %v1096
        %1102 = vst [vmem:[%s466] sm:$0xc0] %v1098
        %1103 = vst [vmem:[%s466 + $0x8] sm:$0xc0] %v1099
        %1104 = vst [vmem:[%s466 + $0x10] sm:$0x1] %v1100
        %1105 = vst [vmem:[%s466 + $0x18] sm:$0x1] %v1101
        %1107 = vset.pattern.permute.xlu0 0
        %1108 = vperm.xlu0 %1107, %v1079
        %v1109 = vpop.permute.xlu0 %1108
        %v1110 = vrot.slane %v1109, 7
        %v1112 = vmul.f32 %v1073, %v1110
        %v1113 = vmul.f32 %v1075, %v1110
        %1114 = vst [vmem:[%s466 + $0x10] sm:$0xe] %v1112
        %1115 = vst [vmem:[%s466 + $0x18] sm:$0xe] %v1113
        %v1116 = vld [vmem:[%s466] sm:$0xff]
        %v1117 = vld [vmem:[%s466 + $0x8] sm:$0xff]
        %v1118 = vld [vmem:[%s466 + $0x10] sm:$0xf]
        %v1119 = vld [vmem:[%s466 + $0x18] sm:$0xf]
        %v1120 = vld [vmem:[%s5] sm:$0xff]
        %v1121 = vld [vmem:[%s5 + $0x8] sm:$0xff]
        %v1122 = vld [vmem:[%s5 + $0x10] sm:$0x1]
        %v1123 = vld [vmem:[%s5 + $0x18] sm:$0x1]
        %v1124 = vld [vmem:[%s6] sm:$0xff]
        %v1125 = vld [vmem:[%s6 + $0x8] sm:$0xff]
        %v1126 = vpack.c.bf16 %v1125, %v1124
        %1129 = vrot.lane.b32.xlu0 %v1117, 17
        %v1130 = vpop.permute.xlu0 %1129
        %1131 = vrot.lane.b32.xlu0 %v1119, 17
        %v1132 = vpop.permute.xlu0 %1131
        %1137 = vrot.lane.b32.xlu0 %v1116, 17
        %v1138 = vpop.permute.xlu0 %1137
        %1139 = vrot.lane.b32.xlu0 %v1118, 17
        %v1140 = vpop.permute.xlu0 %1139
        %vm1141 = vcmask 138240
        %v1142 = vsel %vm1141, %v1138, %v1130
        %v1143 = vsel %vm1141, %v1140, %v1132
        %v1148 = vsel %vm1141, %v1130, %v1138
        %v1149 = vsel %vm1141, %v1132, %v1140
        %v1150 = vlaneseq
        %v1151 = vshrl.u32 %v1150, 7
        %v1152 = vsub.s32 0, %v1151
        %v1153 = vrot.slane %v1120, %v1152
        %v1154 = vlaneseq
        %v1155 = vshrl.u32 %v1154, 7
        %v1156 = vsub.s32 0, %v1155
        %v1157 = vrot.slane %v1121, %v1156
        %v1158 = vmul.f32 %v1148, %v1153
        %v1159 = vmul.f32 %v1142, %v1157
        %v1160 = vmul.f32 %v1149, %v1153
        %v1161 = vmul.f32 %v1143, %v1157
        %1162 = vrot.lane.b32.xlu0 %v1117, 16
        %v1163 = vpop.permute.xlu0 %1162
        %1164 = vrot.lane.b32.xlu0 %v1119, 16
        %v1165 = vpop.permute.xlu0 %1164
        %1168 = vrot.lane.b32.xlu0 %v1116, 16
        %v1169 = vpop.permute.xlu0 %1168
        %1170 = vrot.lane.b32.xlu0 %v1118, 16
        %v1171 = vpop.permute.xlu0 %1170
        %vm1172 = vcmask 130048
        %v1173 = vsel %vm1172, %v1169, %v1163
        %v1174 = vsel %vm1172, %v1171, %v1165
        %v1179 = vsel %vm1172, %v1163, %v1169
        %v1180 = vsel %vm1172, %v1165, %v1171
        %v1181 = vlaneseq
        %v1182 = vshrl.u32 %v1181, 7
        %v1183 = vsub.s32 1, %v1182
        %v1184 = vrot.slane %v1120, %v1183
        %v1185 = vlaneseq
        %v1186 = vshrl.u32 %v1185, 7
        %v1187 = vsub.s32 1, %v1186
        %v1188 = vrot.slane %v1121, %v1187
        %v1189 = vmul.f32 %v1179, %v1184
        %v1190 = vmul.f32 %v1173, %v1188
        %v1191 = vmul.f32 %v1180, %v1184
        %v1192 = vmul.f32 %v1174, %v1188
        %1193 = vrot.lane.b32.xlu0 %v1117, 15
        %v1194 = vpop.permute.xlu0 %1193
        %1195 = vrot.lane.b32.xlu0 %v1119, 15
        %v1196 = vpop.permute.xlu0 %1195
        %1199 = vrot.lane.b32.xlu0 %v1116, 15
        %v1200 = vpop.permute.xlu0 %1199
        %1201 = vrot.lane.b32.xlu0 %v1118, 15
        %v1202 = vpop.permute.xlu0 %1201
        %vm1203 = vcmask 121856
        %v1204 = vsel %vm1203, %v1200, %v1194
        %v1205 = vsel %vm1203, %v1202, %v1196
        %v1210 = vsel %vm1203, %v1194, %v1200
        %v1211 = vsel %vm1203, %v1196, %v1202
        %v1212 = vlaneseq
        %v1213 = vshrl.u32 %v1212, 7
        %v1214 = vsub.s32 2, %v1213
        %v1215 = vrot.slane %v1120, %v1214
        %v1216 = vlaneseq
        %v1217 = vshrl.u32 %v1216, 7
        %v1218 = vsub.s32 2, %v1217
        %v1219 = vrot.slane %v1121, %v1218
        %v1220 = vmul.f32 %v1210, %v1215
        %v1221 = vmul.f32 %v1204, %v1219
        %v1222 = vmul.f32 %v1211, %v1215
        %v1223 = vmul.f32 %v1205, %v1219
        %1224 = vrot.lane.b32.xlu0 %v1117, 1
        %v1225 = vpop.permute.xlu0 %1224
        %1226 = vrot.lane.b32.xlu0 %v1119, 1
        %v1227 = vpop.permute.xlu0 %1226
        %1230 = vrot.lane.b32.xlu0 %v1116, 1
        %v1231 = vpop.permute.xlu0 %1230
        %1232 = vrot.lane.b32.xlu0 %v1118, 1
        %v1233 = vpop.permute.xlu0 %1232
        %vm1234 = vcmask 7168
        %v1235 = vsel %vm1234, %v1231, %v1225
        %v1236 = vsel %vm1234, %v1233, %v1227
        %v1241 = vsel %vm1234, %v1225, %v1231
        %v1242 = vsel %vm1234, %v1227, %v1233
        %v1243 = vlaneseq
        %v1244 = vshrl.u32 %v1243, 7
        %v1245 = vsub.s32 3, %v1244
        %v1246 = vrot.slane %v1120, %v1245
        %v1247 = vlaneseq
        %v1248 = vshrl.u32 %v1247, 7
        %v1249 = vsub.s32 3, %v1248
        %v1250 = vrot.slane %v1121, %v1249
        %v1251 = vmul.f32 %v1241, %v1246
        %v1252 = vmul.f32 %v1235, %v1250
        %v1253 = vmul.f32 %v1242, %v1246
        %v1254 = vmul.f32 %v1236, %v1250
        %v1255 = vlaneseq
        %v1256 = vshrl.u32 %v1255, 7
        %v1257 = vsub.s32 4, %v1256
        %v1258 = vrot.slane %v1120, %v1257
        %v1259 = vlaneseq
        %v1260 = vshrl.u32 %v1259, 7
        %v1261 = vsub.s32 4, %v1260
        %v1262 = vrot.slane %v1121, %v1261
        %v1263 = vmul.f32 %v1116, %v1258
        %v1264 = vmul.f32 %v1117, %v1262
        %v1265 = vmul.f32 %v1118, %v1258
        %v1266 = vmul.f32 %v1119, %v1262
        %1267 = vrot.lane.b32.xlu0 %v1116, 127
        %v1268 = vpop.permute.xlu0 %1267
        %1269 = vrot.lane.b32.xlu0 %v1117, 127
        %v1270 = vpop.permute.xlu0 %1269
        %1271 = vrot.lane.b32.xlu0 %v1118, 127
        %v1272 = vpop.permute.xlu0 %1271
        %1273 = vrot.lane.b32.xlu0 %v1119, 127
        %v1274 = vpop.permute.xlu0 %1273
        %vm1275 = vcmask 1039360
        %v1276 = vsel %vm1275, %v1268, %v1270
        %v1277 = vsel %vm1275, %v1272, %v1274
        %v1284 = vsel %vm1275, %v1270, %v1268
        %v1285 = vsel %vm1275, %v1274, %v1272
        %v1286 = vlaneseq
        %v1287 = vshrl.u32 %v1286, 7
        %v1288 = vsub.s32 5, %v1287
        %v1289 = vrot.slane %v1120, %v1288
        %v1290 = vlaneseq
        %v1291 = vshrl.u32 %v1290, 7
        %v1292 = vsub.s32 5, %v1291
        %v1293 = vrot.slane %v1121, %v1292
        %v1294 = vmul.f32 %v1276, %v1289
        %v1295 = vmul.f32 %v1284, %v1293
        %v1296 = vmul.f32 %v1277, %v1289
        %v1297 = vmul.f32 %v1285, %v1293
        %1298 = vrot.lane.b32.xlu0 %v1116, 113
        %v1299 = vpop.permute.xlu0 %1298
        %1300 = vrot.lane.b32.xlu0 %v1117, 113
        %v1301 = vpop.permute.xlu0 %1300
        %1302 = vrot.lane.b32.xlu0 %v1118, 113
        %v1303 = vpop.permute.xlu0 %1302
        %1304 = vrot.lane.b32.xlu0 %v1119, 113
        %v1305 = vpop.permute.xlu0 %1304
        %vm1306 = vcmask 924672
        %v1307 = vsel %vm1306, %v1299, %v1301
        %v1308 = vsel %vm1306, %v1303, %v1305
        %v1315 = vsel %vm1306, %v1301, %v1299
        %v1316 = vsel %vm1306, %v1305, %v1303
        %v1317 = vlaneseq
        %v1318 = vshrl.u32 %v1317, 7
        %v1319 = vsub.s32 6, %v1318
        %v1320 = vrot.slane %v1120, %v1319
        %v1321 = vlaneseq
        %v1322 = vshrl.u32 %v1321, 7
        %v1323 = vsub.s32 6, %v1322
        %v1324 = vrot.slane %v1121, %v1323
        %v1325 = vmul.f32 %v1307, %v1320
        %v1326 = vmul.f32 %v1315, %v1324
        %v1327 = vmul.f32 %v1308, %v1320
        %v1328 = vmul.f32 %v1316, %v1324
        %1329 = vrot.lane.b32.xlu0 %v1116, 112
        %v1330 = vpop.permute.xlu0 %1329
        %1331 = vrot.lane.b32.xlu0 %v1117, 112
        %v1332 = vpop.permute.xlu0 %1331
        %1333 = vrot.lane.b32.xlu0 %v1118, 112
        %v1334 = vpop.permute.xlu0 %1333
        %1335 = vrot.lane.b32.xlu0 %v1119, 112
        %v1336 = vpop.permute.xlu0 %1335
        %vm1337 = vcmask 916480
        %v1338 = vsel %vm1337, %v1330, %v1332
        %v1339 = vsel %vm1337, %v1334, %v1336
        %v1346 = vsel %vm1337, %v1332, %v1330
        %v1347 = vsel %vm1337, %v1336, %v1334
        %v1348 = vlaneseq
        %v1349 = vshrl.u32 %v1348, 7
        %v1350 = vsub.s32 7, %v1349
        %v1351 = vrot.slane %v1120, %v1350
        %v1352 = vlaneseq
        %v1353 = vshrl.u32 %v1352, 7
        %v1354 = vsub.s32 7, %v1353
        %v1355 = vrot.slane %v1121, %v1354
        %v1356 = vmul.f32 %v1338, %v1351
        %v1357 = vmul.f32 %v1346, %v1355
        %v1358 = vmul.f32 %v1339, %v1351
        %v1359 = vmul.f32 %v1347, %v1355
        %1360 = vrot.lane.b32.xlu0 %v1116, 111
        %v1361 = vpop.permute.xlu0 %1360
        %1362 = vrot.lane.b32.xlu0 %v1117, 111
        %v1363 = vpop.permute.xlu0 %1362
        %1364 = vrot.lane.b32.xlu0 %v1118, 111
        %v1365 = vpop.permute.xlu0 %1364
        %1366 = vrot.lane.b32.xlu0 %v1119, 111
        %v1367 = vpop.permute.xlu0 %1366
        %vm1368 = vcmask 908288
        %v1369 = vsel %vm1368, %v1361, %v1363
        %v1370 = vsel %vm1368, %v1365, %v1367
        %v1377 = vsel %vm1368, %v1363, %v1361
        %v1378 = vsel %vm1368, %v1367, %v1365
        %v1379 = vlaneseq
        %v1380 = vshrl.u32 %v1379, 7
        %v1381 = vsub.s32 0, %v1380
        %v1382 = vrot.slane %v1122, %v1381
        %v1383 = vlaneseq
        %v1384 = vshrl.u32 %v1383, 7
        %v1385 = vsub.s32 0, %v1384
        %v1386 = vrot.slane %v1123, %v1385
        %v1387 = vmul.f32 %v1369, %v1382
        %v1388 = vmul.f32 %v1377, %v1386
        %v1389 = vmul.f32 %v1370, %v1382
        %v1390 = vmul.f32 %v1378, %v1386
        %vm1395 = vcmask 1043456
        %v1396 = vrot.slane %v1189, 4
        %v1397 = vrot.slane %v1190, 4
        %v1398 = vrot.slane %v1191, 4
        %v1399 = vsel %vm1395, %v1396, %v1398
        %v1400 = vrot.slane %v1192, 4
        %v1401 = vsel %vm1395, %v1397, %v1400
        %v1410 = vrot.slane %v1251, 4
        %v1411 = vrot.slane %v1252, 4
        %v1412 = vrot.slane %v1253, 4
        %v1413 = vsel %vm1395, %v1410, %v1412
        %v1414 = vrot.slane %v1254, 4
        %v1415 = vsel %vm1395, %v1411, %v1414
        %v1424 = vrot.slane %v1294, 4
        %v1425 = vrot.slane %v1295, 4
        %v1426 = vrot.slane %v1296, 4
        %v1427 = vsel %vm1395, %v1424, %v1426
        %v1428 = vrot.slane %v1297, 4
        %v1429 = vsel %vm1395, %v1425, %v1428
        %v1438 = vrot.slane %v1356, 4
        %v1439 = vrot.slane %v1357, 4
        %v1440 = vrot.slane %v1358, 4
        %v1441 = vsel %vm1395, %v1438, %v1440
        %v1442 = vrot.slane %v1359, 4
        %v1443 = vsel %vm1395, %v1439, %v1442
        %v1448 = vsel %vm1395, %v1160, %v1396
        %v1449 = vsel %vm1395, %v1161, %v1397
        %v1450 = vsel %vm1395, %v1222, %v1410
        %v1451 = vsel %vm1395, %v1223, %v1411
        %v1452 = vsel %vm1395, %v1265, %v1424
        %v1453 = vsel %vm1395, %v1266, %v1425
        %v1454 = vsel %vm1395, %v1327, %v1438
        %v1455 = vsel %vm1395, %v1328, %v1439
        %v1456 = vpack.c.bf16 %v1448, %v1158
        %v1457 = vpack.c.bf16 %v1449, %v1159
        %v1458 = vpack.c.bf16 %v1220, %v1399
        %v1459 = vpack.c.bf16 %v1221, %v1401
        %v1460 = vpack.c.bf16 %v1413, %v1450
        %v1461 = vpack.c.bf16 %v1415, %v1451
        %v1462 = vpack.c.bf16 %v1452, %v1263
        %v1463 = vpack.c.bf16 %v1453, %v1264
        %v1464 = vpack.c.bf16 %v1325, %v1427
        %v1465 = vpack.c.bf16 %v1326, %v1429
        %v1466 = vpack.c.bf16 %v1441, %v1454
        %v1467 = vpack.c.bf16 %v1443, %v1455
        %v1468 = vpack.c.bf16 %v1389, %v1387
        %v1469 = vpack.c.bf16 %v1390, %v1388
        %v1470 = vld [vmem:[%s7] sm:$0xff]
        %v1471 = vld [vmem:[%s7 + $0x8] sm:$0xff]
        %1473 = vset.pattern.permute.xlu0 0
        %1474 = vperm.xlu0 %1473, %v1470
        %v1475 = vpop.permute.xlu0 %1474
        %1478 = vset.pattern.permute.xlu0 0
        %1479 = vperm.xlu0 %1478, %v1471
        %v1480 = vpop.permute.xlu0 %1479
        %vm1482 = vcmask 883712
        %v1484 = vsel %vm1482, %v1126, 0
        %vm1486 = vcmask 1045504
        %v1488 = vsel %vm1486, %v1468, 0
        %v1491 = vsel %vm1486, %v1469, 0
        %1493 = vmatprep.subr.bf16.mxu0 %v1457
        %1494 = vmatpush1.bf16.msra.mxu0 %v1456
        %1495 = vmatprep.subr.bf16.mxu0 %v1459
        %1496 = vmatpush1.bf16.msra.mxu0 %v1458
        %1497 = vmatprep.subr.bf16.mxu0 %v1461
        %1498 = vmatpush1.bf16.msra.mxu0 %v1460
        %1499 = vmatprep.subr.bf16.mxu0 %v1463
        %1500 = vmatpush1.bf16.msra.mxu0 %v1462
        %1501 = vmatprep.subr.bf16.mxu0 %v1465
        %1502 = vmatpush1.bf16.msra.mxu0 %v1464
        %1503 = vmatprep.subr.bf16.mxu0 %v1467
        %1504 = vmatpush1.bf16.msra.mxu0 %v1466
        %1505 = vmatprep.subr.bf16.mxu0 %v1491
        %1506 = vmatpush1.bf16.msra.mxu0 %v1488
        %1507 = vmatprep.subr.bf16.mxu0 0
        %1508 = vmatpush1.bf16.msra.mxu0 0
        %1509 = vmatprep.subr.bf16.mxu0 0
        %1510 = vmatpush1.bf16.msra.mxu0 0
        %1511 = vmatprep.subr.bf16.mxu0 0
        %1512 = vmatpush1.bf16.msra.mxu0 0
        %1513 = vmatprep.subr.bf16.mxu0 0
        %1514 = vmatpush1.bf16.msra.mxu0 0
        %1515 = vmatprep.subr.bf16.mxu0 0
        %1516 = vmatpush1.bf16.msra.mxu0 0
        %1517 = vmatprep.subr.bf16.mxu0 0
        %1518 = vmatpush1.bf16.msra.mxu0 0
        %1519 = vmatprep.subr.bf16.mxu0 0
        %1520 = vmatpush1.bf16.msra.mxu0 0
        %1521 = vmatprep.subr.bf16.mxu0 0
        %1522 = vmatpush1.bf16.msra.mxu0 0
        %1523 = vmatprep.subr.bf16.mxu0 0
        %1524 = vmatpush1.bf16.msra.mxu0 0
        %1525 = vmatprep.mubr.bf16.mxu0 0
        %1526 = vmatmul.mubr.bf16.gmra.mrb[0].mxu0 %v1484
        %v1527 = vpop.f32.mrb[0].mxu0
        %v1528 = vadd.f32 %v1475, %v1527
        %v1529 = vpop.f32.mrb[0].mxu0
        %v1530 = vadd.f32 %v1475, %v1529
        %v1531 = vpop.f32.mrb[0].mxu0
        %v1532 = vadd.f32 %v1480, %v1531
        %v1533 = vpop.f32.mrb[0].mxu0
        %v1534 = vadd.f32 %v1480, %v1533
        %1535 = vdwg.mxu0
        %v1536 = vmax.f32 %v1528, 0.0
        %v1537 = vmax.f32 %v1530, 0.0
        %v1538 = vmax.f32 %v1532, 0.0
        %v1539 = vmax.f32 %v1534, 0.0
        %v1540 = vld [vmem:[%s8] sm:$0x77]
        %v1542 = vcombine.high %v1540, %v1540
        %v1544 = vpack.c.bf16 %v1540, %v1540
        %v1545 = vpack.c.bf16 %v1542, %v1542
        %1548 = vrot.lane.b32.xlu0 %v1537, 17
        %v1549 = vpop.permute.xlu0 %1548
        %1550 = vrot.lane.b32.xlu0 %v1539, 17
        %v1551 = vpop.permute.xlu0 %1550
        %1556 = vrot.lane.b32.xlu0 %v1536, 17
        %v1557 = vpop.permute.xlu0 %1556
        %1558 = vrot.lane.b32.xlu0 %v1538, 17
        %v1559 = vpop.permute.xlu0 %1558
        %v1560 = vsel %vm1141, %v1557, %v1549
        %v1561 = vsel %vm1141, %v1559, %v1551
        %v1566 = vsel %vm1141, %v1549, %v1557
        %v1567 = vsel %vm1141, %v1551, %v1559
        %v1568 = vmul.f32 %v1566, %v1153
        %v1569 = vmul.f32 %v1560, %v1157
        %v1570 = vmul.f32 %v1567, %v1153
        %v1571 = vmul.f32 %v1561, %v1157
        %1572 = vrot.lane.b32.xlu0 %v1537, 16
        %v1573 = vpop.permute.xlu0 %1572
        %1574 = vrot.lane.b32.xlu0 %v1539, 16
        %v1575 = vpop.permute.xlu0 %1574
        %1578 = vrot.lane.b32.xlu0 %v1536, 16
        %v1579 = vpop.permute.xlu0 %1578
        %1580 = vrot.lane.b32.xlu0 %v1538, 16
        %v1581 = vpop.permute.xlu0 %1580
        %v1582 = vsel %vm1172, %v1579, %v1573
        %v1583 = vsel %vm1172, %v1581, %v1575
        %v1588 = vsel %vm1172, %v1573, %v1579
        %v1589 = vsel %vm1172, %v1575, %v1581
        %v1590 = vmul.f32 %v1588, %v1184
        %v1591 = vmul.f32 %v1582, %v1188
        %v1592 = vmul.f32 %v1589, %v1184
        %v1593 = vmul.f32 %v1583, %v1188
        %1594 = vrot.lane.b32.xlu0 %v1537, 15
        %v1595 = vpop.permute.xlu0 %1594
        %1596 = vrot.lane.b32.xlu0 %v1539, 15
        %v1597 = vpop.permute.xlu0 %1596
        %1600 = vrot.lane.b32.xlu0 %v1536, 15
        %v1601 = vpop.permute.xlu0 %1600
        %1602 = vrot.lane.b32.xlu0 %v1538, 15
        %v1603 = vpop.permute.xlu0 %1602
        %v1604 = vsel %vm1203, %v1601, %v1595
        %v1605 = vsel %vm1203, %v1603, %v1597
        %v1610 = vsel %vm1203, %v1595, %v1601
        %v1611 = vsel %vm1203, %v1597, %v1603
        %v1612 = vmul.f32 %v1610, %v1215
        %v1613 = vmul.f32 %v1604, %v1219
        %v1614 = vmul.f32 %v1611, %v1215
        %v1615 = vmul.f32 %v1605, %v1219
        %1616 = vrot.lane.b32.xlu0 %v1537, 1
        %v1617 = vpop.permute.xlu0 %1616
        %1618 = vrot.lane.b32.xlu0 %v1539, 1
        %v1619 = vpop.permute.xlu0 %1618
        %1622 = vrot.lane.b32.xlu0 %v1536, 1
        %v1623 = vpop.permute.xlu0 %1622
        %1624 = vrot.lane.b32.xlu0 %v1538, 1
        %v1625 = vpop.permute.xlu0 %1624
        %v1626 = vsel %vm1234, %v1623, %v1617
        %v1627 = vsel %vm1234, %v1625, %v1619
        %v1632 = vsel %vm1234, %v1617, %v1623
        %v1633 = vsel %vm1234, %v1619, %v1625
        %v1634 = vmul.f32 %v1632, %v1246
        %v1635 = vmul.f32 %v1626, %v1250
        %v1636 = vmul.f32 %v1633, %v1246
        %v1637 = vmul.f32 %v1627, %v1250
        %v1638 = vmul.f32 %v1536, %v1258
        %v1639 = vmul.f32 %v1537, %v1262
        %v1640 = vmul.f32 %v1538, %v1258
        %v1641 = vmul.f32 %v1539, %v1262
        %1642 = vrot.lane.b32.xlu0 %v1536, 127
        %v1643 = vpop.permute.xlu0 %1642
        %1644 = vrot.lane.b32.xlu0 %v1537, 127
        %v1645 = vpop.permute.xlu0 %1644
        %1646 = vrot.lane.b32.xlu0 %v1538, 127
        %v1647 = vpop.permute.xlu0 %1646
        %1648 = vrot.lane.b32.xlu0 %v1539, 127
        %v1649 = vpop.permute.xlu0 %1648
        %v1650 = vsel %vm1275, %v1643, %v1645
        %v1651 = vsel %vm1275, %v1647, %v1649
        %v1658 = vsel %vm1275, %v1645, %v1643
        %v1659 = vsel %vm1275, %v1649, %v1647
        %v1660 = vmul.f32 %v1650, %v1289
        %v1661 = vmul.f32 %v1658, %v1293
        %v1662 = vmul.f32 %v1651, %v1289
        %v1663 = vmul.f32 %v1659, %v1293
        %1664 = vrot.lane.b32.xlu0 %v1536, 113
        %v1665 = vpop.permute.xlu0 %1664
        %1666 = vrot.lane.b32.xlu0 %v1537, 113
        %v1667 = vpop.permute.xlu0 %1666
        %1668 = vrot.lane.b32.xlu0 %v1538, 113
        %v1669 = vpop.permute.xlu0 %1668
        %1670 = vrot.lane.b32.xlu0 %v1539, 113
        %v1671 = vpop.permute.xlu0 %1670
        %v1672 = vsel %vm1306, %v1665, %v1667
        %v1673 = vsel %vm1306, %v1669, %v1671
        %v1680 = vsel %vm1306, %v1667, %v1665
        %v1681 = vsel %vm1306, %v1671, %v1669
        %v1682 = vmul.f32 %v1672, %v1320
        %v1683 = vmul.f32 %v1680, %v1324
        %v1684 = vmul.f32 %v1673, %v1320
        %v1685 = vmul.f32 %v1681, %v1324
        %1686 = vrot.lane.b32.xlu0 %v1536, 112
        %v1687 = vpop.permute.xlu0 %1686
        %1688 = vrot.lane.b32.xlu0 %v1537, 112
        %v1689 = vpop.permute.xlu0 %1688
        %1690 = vrot.lane.b32.xlu0 %v1538, 112
        %v1691 = vpop.permute.xlu0 %1690
        %1692 = vrot.lane.b32.xlu0 %v1539, 112
        %v1693 = vpop.permute.xlu0 %1692
        %v1694 = vsel %vm1337, %v1687, %v1689
        %v1695 = vsel %vm1337, %v1691, %v1693
        %v1702 = vsel %vm1337, %v1689, %v1687
        %v1703 = vsel %vm1337, %v1693, %v1691
        %v1704 = vmul.f32 %v1694, %v1351
        %v1705 = vmul.f32 %v1702, %v1355
        %v1706 = vmul.f32 %v1695, %v1351
        %v1707 = vmul.f32 %v1703, %v1355
        %1708 = vrot.lane.b32.xlu0 %v1536, 111
        %v1709 = vpop.permute.xlu0 %1708
        %1710 = vrot.lane.b32.xlu0 %v1537, 111
        %v1711 = vpop.permute.xlu0 %1710
        %1712 = vrot.lane.b32.xlu0 %v1538, 111
        %v1713 = vpop.permute.xlu0 %1712
        %1714 = vrot.lane.b32.xlu0 %v1539, 111
        %v1715 = vpop.permute.xlu0 %1714
        %v1716 = vsel %vm1368, %v1709, %v1711
        %v1717 = vsel %vm1368, %v1713, %v1715
        %v1724 = vsel %vm1368, %v1711, %v1709
        %v1725 = vsel %vm1368, %v1715, %v1713
        %v1726 = vmul.f32 %v1716, %v1382
        %v1727 = vmul.f32 %v1724, %v1386
        %v1728 = vmul.f32 %v1717, %v1382
        %v1729 = vmul.f32 %v1725, %v1386
        %v1730 = vpack.c.bf16 %v1570, %v1568
        %v1731 = vpack.c.bf16 %v1571, %v1569
        %v1732 = vpack.c.bf16 %v1592, %v1590
        %v1733 = vpack.c.bf16 %v1593, %v1591
        %v1734 = vpack.c.bf16 %v1614, %v1612
        %v1735 = vpack.c.bf16 %v1615, %v1613
        %v1736 = vpack.c.bf16 %v1636, %v1634
        %v1737 = vpack.c.bf16 %v1637, %v1635
        %v1738 = vpack.c.bf16 %v1640, %v1638
        %v1739 = vpack.c.bf16 %v1641, %v1639
        %v1740 = vpack.c.bf16 %v1662, %v1660
        %v1741 = vpack.c.bf16 %v1663, %v1661
        %v1742 = vpack.c.bf16 %v1684, %v1682
        %v1743 = vpack.c.bf16 %v1685, %v1683
        %v1744 = vpack.c.bf16 %v1706, %v1704
        %v1745 = vpack.c.bf16 %v1707, %v1705
        %v1746 = vpack.c.bf16 %v1728, %v1726
        %v1747 = vpack.c.bf16 %v1729, %v1727
        %v1748 = vld [vmem:[%s9] sm:$0x7]
        %1750 = vset.pattern.permute.xlu0 0
        %1751 = vperm.xlu0 %1750, %v1748
        %v1752 = vpop.permute.xlu0 %1751
        %v1755 = vsel %vm1172, %v1545, 0
        %1757 = vmatprep.subr.bf16.mxu0 %v1731
        %1758 = vmatpush1.bf16.msra.mxu0 %v1730
        %1759 = vmatprep.subr.bf16.mxu0 %v1733
        %1760 = vmatpush1.bf16.msra.mxu0 %v1732
        %1761 = vmatprep.subr.bf16.mxu0 %v1735
        %1762 = vmatpush1.bf16.msra.mxu0 %v1734
        %1763 = vmatprep.subr.bf16.mxu0 %v1737
        %1764 = vmatpush1.bf16.msra.mxu0 %v1736
        %1765 = vmatprep.subr.bf16.mxu0 %v1739
        %1766 = vmatpush1.bf16.msra.mxu0 %v1738
        %1767 = vmatprep.subr.bf16.mxu0 %v1741
        %1768 = vmatpush1.bf16.msra.mxu0 %v1740
        %1769 = vmatprep.subr.bf16.mxu0 %v1743
        %1770 = vmatpush1.bf16.msra.mxu0 %v1742
        %1771 = vmatprep.subr.bf16.mxu0 %v1745
        %1772 = vmatpush1.bf16.msra.mxu0 %v1744
        %1773 = vmatprep.subr.bf16.mxu0 %v1747
        %1774 = vmatpush1.bf16.msra.mxu0 %v1746
        %1775 = vmatprep.subr.bf16.mxu0 0
        %1776 = vmatpush1.bf16.msra.mxu0 0
        %1777 = vmatprep.subr.bf16.mxu0 0
        %1778 = vmatpush1.bf16.msra.mxu0 0
        %1779 = vmatprep.subr.bf16.mxu0 0
        %1780 = vmatpush1.bf16.msra.mxu0 0
        %1781 = vmatprep.subr.bf16.mxu0 0
        %1782 = vmatpush1.bf16.msra.mxu0 0
        %1783 = vmatprep.subr.bf16.mxu0 0
        %1784 = vmatpush1.bf16.msra.mxu0 0
        %1785 = vmatprep.subr.bf16.mxu0 0
        %1786 = vmatpush1.bf16.msra.mxu0 0
        %1787 = vmatprep.subr.bf16.mxu0 0
        %1788 = vmatpush1.bf16.msra.mxu0 0
        %1789 = vmatprep.mubr.bf16.mxu0 %v1755
        %1790 = vmatmul.mubr.bf16.gmra.mrb[0].mxu0 %v1544
        %v1791 = vpop.f32.mrb[0].mxu0
        %v1792 = vadd.f32 %v1752, %v1791
        %v1793 = vpop.f32.mrb[0].mxu0
        %v1794 = vadd.f32 %v1752, %v1793
        %v1795 = vpop.f32.mrb[0].mxu0
        %v1796 = vpop.f32.mrb[0].mxu0
        %1797 = vdwg.mxu0
        %v1798 = vtanh.pop %v1792
        %v1799 = vtanh.pop %v1794
        %v1802 = vcombine.low %v1798, %v1799
        %1804 = vst [vmem:[%s471] sm:$0x77] %v1802
        %p1805 = scmp.lt.s32.totalorder %s26, 1
        %s1806 = scalar_select %p1805, %s26, 1
        %s1807 = smul.addr %s1806, 4
        %s1808 = smul.addr %s1807, 8
        %s1809 = scalar_lea.vmem %s10, %s1808
        %p1810 = scmp.lt.s32.totalorder %s26, 1
        %s1811 = scalar_select %p1810, %s26, 1
        %s1812 = smul.addr %s1811, 2
        %s1813 = smul.addr %s1812, 4
        %s1814 = scalar_lea.vmem %s11, %s1813
        // Predicated region
        $region65: #{tpu_custom_call.1} parent=59 // pred_check
          %p1815 = pneg %p274
        $region66: #{tpu_custom_call.1} parent=59 // pred_check_branch
          %1817 = sbr.rel (%p1815) target = $region68
        $region67: #{tpu_custom_call.1} parent=59 // pred_region
          _
        $region68: #{tpu_custom_call.1} parent=59 // pred_fallthru
          _
        // Predicated region
        $region69: #{tpu_custom_call.1} parent=59 // pred_check
          %p1818 = pneg %p300
        $region70: #{tpu_custom_call.1} parent=59 // pred_check_branch
          %1820 = sbr.rel (%p1818) target = $region72
        $region71: #{tpu_custom_call.1} parent=59 // pred_region
          _
        $region72: #{tpu_custom_call.1} parent=59 // pred_fallthru
          _
      $region60: #{tpu_custom_call.1} parent=5 // pred_fallthru
        _
      %p1821 = scmp.le.s32.totalorder 2, %s21
      // Predicated region
      $region73: #{tpu_custom_call.1} parent=5 // pred_check
        %p1822 = pneg %p1821
      $region74: #{tpu_custom_call.1} parent=5 // pred_check_branch
        %1824 = sbr.rel (%p1822) target = $region76
      $region75: #{tpu_custom_call.1} parent=5 // pred_region
        %s1825 = ssub.s32 %s21, 2
        // Predicated region
        $region77: #{tpu_custom_call.1} parent=75 // pred_check
          %p1826 = pneg %p280
        $region78: #{tpu_custom_call.1} parent=75 // pred_check_branch
          %1828 = sbr.rel (%p1826) target = $region80
        $region79: #{tpu_custom_call.1} parent=75 // pred_region
          %p1829 = scmp.lt.s32.totalorder %s27, 1
          %s1830 = scalar_select %p1829, %s27, 1
          %s1831 = smul.addr %s1830, 4
          %s1832 = smul.addr %s1831, 8
          %s1833 = scalar_lea.vmem %s10, %s1832
        $region80: #{tpu_custom_call.1} parent=75 // pred_fallthru
          _
        // Predicated region
        $region81: #{tpu_custom_call.1} parent=75 // pred_check
          %p1834 = pneg %p306
        $region82: #{tpu_custom_call.1} parent=75 // pred_check_branch
          %1836 = sbr.rel (%p1834) target = $region84
        $region83: #{tpu_custom_call.1} parent=75 // pred_region
          %p1837 = scmp.lt.s32.totalorder %s27, 1
          %s1838 = scalar_select %p1837, %s27, 1
          %s1839 = smul.addr %s1838, 2
          %s1840 = smul.addr %s1839, 4
          %s1841 = scalar_lea.vmem %s11, %s1840
        $region84: #{tpu_custom_call.1} parent=75 // pred_fallthru
          _
      $region76: #{tpu_custom_call.1} parent=5 // pred_fallthru
        _
    $region6: #{tpu_custom_call.1} parent=1 // loop_footer
      %s25 = sadd.s32 1, %s21
    $region7: #{tpu_custom_call.1} parent=1 // loop_footer_branch
      %20 = sbr.rel target = $region3
    $region8: #{tpu_custom_call.1} parent=1 // loop_exit
      _
    %1842 = vsyncpa [#allocation3], 1
    %s1843 = scalar_lea.sflag [#allocation3], 1
    %1844 = vsyncpa %s1843, 1

</llo_original>
